<compile_context>
chip_gen: v7x
topology: tpu7x:2x2x1
jax: 0.10.0
libtpu: 0.0.40
codegen_flags: <defaults>
</compile_context>

<pallas_src>
import math

import jax
import jax.numpy as jnp
from jax.experimental import pallas as pl
from jax.experimental.pallas import tpu as pltpu


def _layer_norm(x, gamma, beta, eps=1e-5):
    mu = jnp.mean(x, axis=-1, keepdims=True)
    var = jnp.mean((x - mu) ** 2, axis=-1, keepdims=True)
    return (x - mu) * jax.lax.rsqrt(var + eps) * gamma + beta


def _make_kernel(num_heads):
    def kernel(x_ref, wqkv_ref, wo_ref, g1_ref, b1_ref,
               w1_ref, bf1_ref, w2_ref, bf2_ref, g2_ref, b2_ref, out_ref):
        xb = x_ref[...]                            # (TB, S, D) f32
        TB, S, D = xb.shape
        H = wqkv_ref.shape[1] // 3                 # hidden size
        hd = H // num_heads                        # head dim
        N = TB * S

        x2 = xb.reshape(N, D)

        # ---- fused QKV projection (bf16 MXU operands, f32 accumulate) ------
        qkv = jnp.dot(x2.astype(jnp.bfloat16), wqkv_ref[...],
                      preferred_element_type=jnp.float32)          # (N, 3H)

        def to_heads(off):
            # lane block [off, off+H) of qkv -> head-major (num_heads*TB, S, hd)
            parts = [qkv[:, off + h * hd: off + (h + 1) * hd].reshape(TB, S, hd)
                     for h in range(num_heads)]
            return jnp.concatenate(parts, axis=0)

        q = to_heads(0).astype(jnp.bfloat16)       # scale pre-folded into W_q
        k = to_heads(H).astype(jnp.bfloat16)
        v = to_heads(2 * H).astype(jnp.bfloat16)

        # ---- head-batched scaled dot-product attention ----------------------
        s = jnp.einsum('bqd,bkd->bqk', q, k,
                       preferred_element_type=jnp.float32)          # (nh*TB, S, S)
        s = s - jnp.max(s, axis=-1, keepdims=True)
        p = jnp.exp(s)
        p = p * pl.reciprocal(jnp.sum(p, axis=-1, keepdims=True), approx=True)
        # TODO(synk): attention dropout omitted (module evaluated in eval mode).

        ho = jnp.einsum('bqk,bkd->bqd', p.astype(jnp.bfloat16), v,
                        preferred_element_type=jnp.float32)         # (nh*TB, S, hd)
        ho = ho.reshape(num_heads, N, hd).astype(jnp.bfloat16)

        # ---- output projection with W_o folded over heads (no concat) ------
        attn = jnp.einsum('hnd,hdo->hno', ho, wo_ref[...],
                          preferred_element_type=jnp.float32).sum(axis=0)  # (N, D)

        # ---- add & norm 1 (f32) ---------------------------------------------
        res1 = _layer_norm(x2 + attn, g1_ref[...], b1_ref[...])

        # ---- feed-forward ----------------------------------------------------
        h1 = jnp.dot(res1.astype(jnp.bfloat16), w1_ref[...],
                     preferred_element_type=jnp.float32) + bf1_ref[...]
        h1 = jnp.maximum(h1, 0.0)                                   # ReLU
        ffn = jnp.dot(h1.astype(jnp.bfloat16), w2_ref[...],
                      preferred_element_type=jnp.float32) + bf2_ref[...]
        # TODO(synk): self.dropout(linear_out) omitted (identity in eval mode).

        # ---- add & norm 2 ----------------------------------------------------
        res2 = _layer_norm(res1 + ffn, g2_ref[...], b2_ref[...])
        out_ref[...] = res2.reshape(TB, S, D).astype(out_ref.dtype)

    return kernel


def _pick_batch_tile(B, S):
    """Largest batch tile that still leaves >= 2 grid steps (megacore),
    restricted to layout-friendly cases (S a multiple of the 8-sublane tile)."""
    if B >= 2 and S % 8 == 0:
        for tb in range(B // 2, 0, -1):
            if B % tb == 0:
                return tb
    return 1


def encoder_transformer_block(x, params, num_heads):
    """x: (B, S, D) float32.  params: dict of f32 weights in (in, out) layout."""
    B, S, D = x.shape
    H = params["wq"].shape[1]
    F = params["w1"].shape[1]
    assert H % num_heads == 0, "hidden_size must be divisible by num_heads"
    hd = H // num_heads

    TB = _pick_batch_tile(B, S)
    grid = (B // TB,)

    # Fold the 1/sqrt(hd) scale into W_q, fuse the three projections into one
    # (D, 3H) weight, and cast all MXU weights to bf16 (halves HBM traffic).
    scale = 1.0 / math.sqrt(hd)
    wqkv = jnp.concatenate(
        [params["wq"] * scale, params["wk"], params["wv"]], axis=1
    ).astype(jnp.bfloat16)                                      # (D, 3H)
    wo = params["wo"].reshape(num_heads, hd, D).astype(jnp.bfloat16)
    w1 = params["w1"].astype(jnp.bfloat16)                      # (D, F)
    w2 = params["w2"].astype(jnp.bfloat16)                      # (F, D)

    def const(shape):
        return pl.BlockSpec(shape, lambda b: (0,) * len(shape))

    # Advisory cost estimate (matmul FLOPs, exp/rsqrt/recip, HBM bytes).
    flops = 2 * B * S * (3 * D * H + 2 * S * H + H * D + 2 * D * F)
    transcendentals = B * num_heads * S * (S + 1) + 2 * B * S
    bytes_accessed = (2 * B * S * D * 4
                      + (wqkv.size + wo.size + w1.size + w2.size) * 2
                      + (6 * D + F) * 4)

    return pl.pallas_call(
        _make_kernel(num_heads),
        out_shape=jax.ShapeDtypeStruct((B, S, D), jnp.float32),
        grid_spec=pltpu.PrefetchScalarGridSpec(
            num_scalar_prefetch=0,
            grid=grid,
            in_specs=[
                pl.BlockSpec((TB, S, D), lambda b: (b, 0, 0)),   # x
                const((D, 3 * H)),                               # W_qkv (bf16)
                const((num_heads, hd, D)),                       # W_o   (bf16)
                const((1, D)), const((1, D)),                    # LN1 gamma / beta
                const((D, F)), const((1, F)),                    # FFN W1 (bf16) / b1
                const((F, D)), const((1, D)),                    # FFN W2 (bf16) / b2
                const((1, D)), const((1, D)),                    # LN2 gamma / beta
            ],
            out_specs=pl.BlockSpec((TB, S, D), lambda b: (b, 0, 0)),
        ),
        compiler_params=pltpu.CompilerParams(
            dimension_semantics=("parallel",),
            vmem_limit_bytes=64 * 1024 * 1024),
        cost_estimate=pl.CostEstimate(
            flops=flops,
            transcendentals=transcendentals,
            bytes_accessed=bytes_accessed),
    )(x, wqkv, wo,
      params["g1"], params["b1"],
      w1, params["bf1"], w2, params["bf2"],
      params["g2"], params["b2"])


def init_params(key, input_size, hidden_size, dim_feedforward):
    D, H, F = input_size, hidden_size, dim_feedforward
    ks = jax.random.split(key, 8)

    def lin(k, fan_in, fan_out):
        bound = 1.0 / math.sqrt(fan_in)
        return jax.random.uniform(k, (fan_in, fan_out), jnp.float32, -bound, bound)

    return {
        # mha projections (nn.Linear with bias=False, d2l-style)
        "wq": lin(ks[0], D, H),
        "wk": lin(ks[1], D, H),
        "wv": lin(ks[2], D, H),
        "wo": lin(ks[3], H, D),   # hidden_size == input_size so residual add works
        # LayerNorm 1
        "g1": jnp.ones((1, D), jnp.float32),
        "b1": jnp.zeros((1, D), jnp.float32),
        # FFN (nn.Linear default bias=True)
        "w1": lin(ks[4], D, F),
        "bf1": jax.random.uniform(ks[5], (1, F), jnp.float32,
                                  -1.0 / math.sqrt(D), 1.0 / math.sqrt(D)),
        "w2": lin(ks[6], F, D),
        "bf2": jax.random.uniform(ks[7], (1, D), jnp.float32,
                                  -1.0 / math.sqrt(F), 1.0 / math.sqrt(F)),
        # LayerNorm 2
        "g2": jnp.ones((1, D), jnp.float32),
        "b2": jnp.zeros((1, D), jnp.float32),
    }


def _reference(x, params, num_heads):
    """Pure-JAX f32 reference of the module forward (eval mode)."""
    B, S, D = x.shape
    H = params["wq"].shape[1]
    hd = H // num_heads

    def ln(t, g, b, eps=1e-5):
        mu = t.mean(-1, keepdims=True)
        var = ((t - mu) ** 2).mean(-1, keepdims=True)
        return (t - mu) / jnp.sqrt(var + eps) * g.reshape(-1) + b.reshape(-1)

    q = (x @ params["wq"]).reshape(B, S, num_heads, hd)
    k = (x @ params["wk"]).reshape(B, S, num_heads, hd)
    v = (x @ params["wv"]).reshape(B, S, num_heads, hd)
    s = jnp.einsum('bqhd,bkhd->bhqk', q, k) / math.sqrt(hd)
    p = jax.nn.softmax(s, axis=-1)
    o = jnp.einsum('bhqk,bkhd->bqhd', p, v).reshape(B, S, H)
    attn = o @ params["wo"]
    res1 = ln(x + attn, params["g1"], params["b1"])
    h1 = jnp.maximum(res1 @ params["w1"] + params["bf1"].reshape(-1), 0.0)
    ffn = h1 @ params["w2"] + params["bf2"].reshape(-1)
    return ln(res1 + ffn, params["g2"], params["b2"])


if __name__ == "__main__":
    B, S = 4, 8
    input_size = 32          # D
    hidden_size = 32         # H (== D so residual add matches the PyTorch module)
    num_heads = 4
    dim_feedforward = 64     # F

    key = jax.random.PRNGKey(0)
    kx, kp = jax.random.split(key)
    x = jax.random.normal(kx, (B, S, input_size), jnp.float32)
    params = init_params(kp, input_size, hidden_size, dim_feedforward)

    out = encoder_transformer_block(x, params, num_heads)
    out = jax.block_until_ready(out)
    assert out.shape == (B, S, input_size) and out.dtype == jnp.float32

    # Sanity check vs. f32 reference (kernel uses bf16 MXU operands + approx
    # reciprocal, so allow a generous tolerance).
    ref = _reference(x, params, num_heads)
    err = float(jnp.max(jnp.abs(out - ref)))
    assert bool(jnp.all(jnp.isfinite(out))) and err < 2e-1, f"max abs err {err}"
    print("KERNEL_OK")
</pallas_src>

<mosaic_0001>
module attributes {stable_mosaic.version = 11 : i64} {
  func.func @kernel(%arg0: i32, %arg1: memref<2x8x32xf32, #tpu.memory_space<vmem>>, %arg2: memref<32x96xbf16, #tpu.memory_space<vmem>>, %arg3: memref<4x8x32xbf16, #tpu.memory_space<vmem>>, %arg4: memref<1x32xf32, #tpu.memory_space<vmem>>, %arg5: memref<1x32xf32, #tpu.memory_space<vmem>>, %arg6: memref<32x64xbf16, #tpu.memory_space<vmem>>, %arg7: memref<1x64xf32, #tpu.memory_space<vmem>>, %arg8: memref<64x32xbf16, #tpu.memory_space<vmem>>, %arg9: memref<1x32xf32, #tpu.memory_space<vmem>>, %arg10: memref<1x32xf32, #tpu.memory_space<vmem>>, %arg11: memref<1x32xf32, #tpu.memory_space<vmem>>, %arg12: memref<2x8x32xf32, #tpu.memory_space<vmem>>) attributes {dimension_semantics = [#tpu.dimension_semantics<parallel>], iteration_bounds = array<i64: 2>, scalar_prefetch = 0 : i64, scratch_operands = 0 : i64, tpu.core_type = #tpu.core_type<tc>, window_params = [{transform_indices = @transform_0, window_bounds = array<i64: 2, 8, 32>}, {pipeline_mode = #tpu.pipeline_mode<synchronous>, transform_indices = @transform_1, window_bounds = array<i64: 32, 96>}, {pipeline_mode = #tpu.pipeline_mode<synchronous>, transform_indices = @transform_2, window_bounds = array<i64: 4, 8, 32>}, {pipeline_mode = #tpu.pipeline_mode<synchronous>, transform_indices = @transform_3, window_bounds = array<i64: 1, 32>}, {pipeline_mode = #tpu.pipeline_mode<synchronous>, transform_indices = @transform_4, window_bounds = array<i64: 1, 32>}, {pipeline_mode = #tpu.pipeline_mode<synchronous>, transform_indices = @transform_5, window_bounds = array<i64: 32, 64>}, {pipeline_mode = #tpu.pipeline_mode<synchronous>, transform_indices = @transform_6, window_bounds = array<i64: 1, 64>}, {pipeline_mode = #tpu.pipeline_mode<synchronous>, transform_indices = @transform_7, window_bounds = array<i64: 64, 32>}, {pipeline_mode = #tpu.pipeline_mode<synchronous>, transform_indices = @transform_8, window_bounds = array<i64: 1, 32>}, {pipeline_mode = #tpu.pipeline_mode<synchronous>, transform_indices = @transform_9, window_bounds = array<i64: 1, 32>}, {pipeline_mode = #tpu.pipeline_mode<synchronous>, transform_indices = @transform_10, window_bounds = array<i64: 1, 32>}, {transform_indices = @transform_11, window_bounds = array<i64: 2, 8, 32>}]} {
    %c0 = arith.constant 0 : index
    %c0_0 = arith.constant 0 : index
    %c0_1 = arith.constant 0 : index
    %0 = vector.load %arg1[%c0, %c0_0, %c0_1] : memref<2x8x32xf32, #tpu.memory_space<vmem>>, vector<2x8x32xf32>
    %1 = vector.shape_cast %0 : vector<2x8x32xf32> to vector<16x32xf32>
    %2 = arith.truncf %1 : vector<16x32xf32> to vector<16x32xbf16>
    %c0_2 = arith.constant 0 : index
    %c0_3 = arith.constant 0 : index
    %3 = vector.load %arg2[%c0_2, %c0_3] : memref<32x96xbf16, #tpu.memory_space<vmem>>, vector<32x96xbf16>
    %cst = arith.constant dense<0.000000e+00> : vector<16x96xf32>
    %4 = tpu.matmul %2, %3, %cst {dimension_numbers = #tpu.dot_dimension_numbers<[1], [0], [0], [1], [0, 0, 1, 1], [], []>} : vector<16x32xbf16>, vector<32x96xbf16>, vector<16x96xf32> -> vector<16x96xf32>
    %5 = vector.extract_strided_slice %4 {offsets = [0, 0], sizes = [16, 8], strides = [1, 1]} : vector<16x96xf32> to vector<16x8xf32>
    %6 = vector.shape_cast %5 : vector<16x8xf32> to vector<2x8x8xf32>
    %7 = vector.extract_strided_slice %4 {offsets = [0, 8], sizes = [16, 8], strides = [1, 1]} : vector<16x96xf32> to vector<16x8xf32>
    %8 = vector.shape_cast %7 : vector<16x8xf32> to vector<2x8x8xf32>
    %9 = vector.extract_strided_slice %4 {offsets = [0, 16], sizes = [16, 8], strides = [1, 1]} : vector<16x96xf32> to vector<16x8xf32>
    %10 = vector.shape_cast %9 : vector<16x8xf32> to vector<2x8x8xf32>
    %11 = vector.extract_strided_slice %4 {offsets = [0, 24], sizes = [16, 8], strides = [1, 1]} : vector<16x96xf32> to vector<16x8xf32>
    %12 = vector.shape_cast %11 : vector<16x8xf32> to vector<2x8x8xf32>
    %13 = tpu.concatenate %6, %8, %10, %12 in 0 : vector<2x8x8xf32>, vector<2x8x8xf32>, vector<2x8x8xf32>, vector<2x8x8xf32> -> vector<8x8x8xf32>
    %14 = arith.truncf %13 : vector<8x8x8xf32> to vector<8x8x8xbf16>
    %15 = vector.extract_strided_slice %4 {offsets = [0, 32], sizes = [16, 8], strides = [1, 1]} : vector<16x96xf32> to vector<16x8xf32>
    %16 = vector.shape_cast %15 : vector<16x8xf32> to vector<2x8x8xf32>
    %17 = vector.extract_strided_slice %4 {offsets = [0, 40], sizes = [16, 8], strides = [1, 1]} : vector<16x96xf32> to vector<16x8xf32>
    %18 = vector.shape_cast %17 : vector<16x8xf32> to vector<2x8x8xf32>
    %19 = vector.extract_strided_slice %4 {offsets = [0, 48], sizes = [16, 8], strides = [1, 1]} : vector<16x96xf32> to vector<16x8xf32>
    %20 = vector.shape_cast %19 : vector<16x8xf32> to vector<2x8x8xf32>
    %21 = vector.extract_strided_slice %4 {offsets = [0, 56], sizes = [16, 8], strides = [1, 1]} : vector<16x96xf32> to vector<16x8xf32>
    %22 = vector.shape_cast %21 : vector<16x8xf32> to vector<2x8x8xf32>
    %23 = tpu.concatenate %16, %18, %20, %22 in 0 : vector<2x8x8xf32>, vector<2x8x8xf32>, vector<2x8x8xf32>, vector<2x8x8xf32> -> vector<8x8x8xf32>
    %24 = arith.truncf %23 : vector<8x8x8xf32> to vector<8x8x8xbf16>
    %25 = vector.extract_strided_slice %4 {offsets = [0, 64], sizes = [16, 8], strides = [1, 1]} : vector<16x96xf32> to vector<16x8xf32>
    %26 = vector.shape_cast %25 : vector<16x8xf32> to vector<2x8x8xf32>
    %27 = vector.extract_strided_slice %4 {offsets = [0, 72], sizes = [16, 8], strides = [1, 1]} : vector<16x96xf32> to vector<16x8xf32>
    %28 = vector.shape_cast %27 : vector<16x8xf32> to vector<2x8x8xf32>
    %29 = vector.extract_strided_slice %4 {offsets = [0, 80], sizes = [16, 8], strides = [1, 1]} : vector<16x96xf32> to vector<16x8xf32>
    %30 = vector.shape_cast %29 : vector<16x8xf32> to vector<2x8x8xf32>
    %31 = vector.extract_strided_slice %4 {offsets = [0, 88], sizes = [16, 8], strides = [1, 1]} : vector<16x96xf32> to vector<16x8xf32>
    %32 = vector.shape_cast %31 : vector<16x8xf32> to vector<2x8x8xf32>
    %33 = tpu.concatenate %26, %28, %30, %32 in 0 : vector<2x8x8xf32>, vector<2x8x8xf32>, vector<2x8x8xf32>, vector<2x8x8xf32> -> vector<8x8x8xf32>
    %34 = arith.truncf %33 : vector<8x8x8xf32> to vector<8x8x8xbf16>
    "tpu.trace_start"() <{level = 10 : i32, message = "bqd,bkd->bqk"}> : () -> ()
    %cst_4 = arith.constant dense<0.000000e+00> : vector<8x8x8xf32>
    %35 = tpu.matmul %14, %24, %cst_4 {dimension_numbers = #tpu.dot_dimension_numbers<[2], [2], [1], [1], [0, 0, 0, 1, 1, 1], [0], [0]>} : vector<8x8x8xbf16>, vector<8x8x8xbf16>, vector<8x8x8xf32> -> vector<8x8x8xf32>
    "tpu.trace_stop"() : () -> ()
    %cst_5 = arith.constant dense<0xFF800000> : vector<8x8xf32>
    %36 = vector.multi_reduction <maximumf>, %35, %cst_5 [2] : vector<8x8x8xf32> to vector<8x8xf32>
    %37 = vector.shape_cast %36 : vector<8x8xf32> to vector<8x8x1xf32>
    %38 = vector.broadcast %37 : vector<8x8x1xf32> to vector<8x8x8xf32>
    %39 = arith.subf %35, %38 : vector<8x8x8xf32>
    %40 = math.exp %39 : vector<8x8x8xf32>
    %cst_6 = arith.constant dense<0.000000e+00> : vector<8x8xf32>
    %41 = vector.multi_reduction <add>, %40, %cst_6 [2] : vector<8x8x8xf32> to vector<8x8xf32>
    %42 = vector.shape_cast %41 : vector<8x8xf32> to vector<8x8x1xf32>
    %43 = tpu.reciprocal %42 {approx = true} : vector<8x8x1xf32> -> vector<8x8x1xf32>
    %44 = vector.broadcast %43 : vector<8x8x1xf32> to vector<8x8x8xf32>
    %45 = arith.mulf %40, %44 : vector<8x8x8xf32>
    %46 = arith.truncf %45 : vector<8x8x8xf32> to vector<8x8x8xbf16>
    "tpu.trace_start"() <{level = 10 : i32, message = "bqk,bkd->bqd"}> : () -> ()
    %cst_7 = arith.constant dense<0.000000e+00> : vector<8x8x8xf32>
    %47 = tpu.matmul %46, %34, %cst_7 {dimension_numbers = #tpu.dot_dimension_numbers<[2], [1], [1], [2], [0, 0, 0, 1, 1, 2], [0], [0]>} : vector<8x8x8xbf16>, vector<8x8x8xbf16>, vector<8x8x8xf32> -> vector<8x8x8xf32>
    "tpu.trace_stop"() : () -> ()
    %48 = vector.shape_cast %47 : vector<8x8x8xf32> to vector<4x16x8xf32>
    %49 = arith.truncf %48 : vector<4x16x8xf32> to vector<4x16x8xbf16>
    %c0_8 = arith.constant 0 : index
    %c0_9 = arith.constant 0 : index
    %c0_10 = arith.constant 0 : index
    %50 = vector.load %arg3[%c0_8, %c0_9, %c0_10] : memref<4x8x32xbf16, #tpu.memory_space<vmem>>, vector<4x8x32xbf16>
    "tpu.trace_start"() <{level = 10 : i32, message = "hnd,hdo->hno"}> : () -> ()
    %cst_11 = arith.constant dense<0.000000e+00> : vector<4x16x32xf32>
    %51 = tpu.matmul %49, %50, %cst_11 {dimension_numbers = #tpu.dot_dimension_numbers<[2], [1], [1], [2], [0, 0, 0, 1, 1, 2], [0], [0]>} : vector<4x16x8xbf16>, vector<4x8x32xbf16>, vector<4x16x32xf32> -> vector<4x16x32xf32>
    "tpu.trace_stop"() : () -> ()
    %cst_12 = arith.constant dense<0.000000e+00> : vector<16x32xf32>
    %52 = vector.multi_reduction <add>, %51, %cst_12 [0] : vector<4x16x32xf32> to vector<16x32xf32>
    %53 = arith.addf %1, %52 : vector<16x32xf32>
    %c0_13 = arith.constant 0 : index
    %c0_14 = arith.constant 0 : index
    %54 = vector.load %arg4[%c0_13, %c0_14] : memref<1x32xf32, #tpu.memory_space<vmem>>, vector<1x32xf32>
    %c0_15 = arith.constant 0 : index
    %c0_16 = arith.constant 0 : index
    %55 = vector.load %arg5[%c0_15, %c0_16] : memref<1x32xf32, #tpu.memory_space<vmem>>, vector<1x32xf32>
    %cst_17 = arith.constant dense<0.000000e+00> : vector<16xf32>
    %56 = vector.multi_reduction <add>, %53, %cst_17 [1] : vector<16x32xf32> to vector<16xf32>
    %57 = vector.shape_cast %56 : vector<16xf32> to vector<16x1xf32>
    %cst_18 = arith.constant 3.200000e+01 : f32
    %58 = vector.broadcast %cst_18 : f32 to vector<16x1xf32>
    %59 = arith.divf %57, %58 : vector<16x1xf32>
    %60 = vector.broadcast %59 : vector<16x1xf32> to vector<16x32xf32>
    %61 = arith.subf %53, %60 : vector<16x32xf32>
    %62 = arith.mulf %61, %61 : vector<16x32xf32>
    %cst_19 = arith.constant dense<0.000000e+00> : vector<16xf32>
    %63 = vector.multi_reduction <add>, %62, %cst_19 [1] : vector<16x32xf32> to vector<16xf32>
    %64 = vector.shape_cast %63 : vector<16xf32> to vector<16x1xf32>
    %cst_20 = arith.constant 3.200000e+01 : f32
    %65 = vector.broadcast %cst_20 : f32 to vector<16x1xf32>
    %66 = arith.divf %64, %65 : vector<16x1xf32>
    %67 = vector.broadcast %59 : vector<16x1xf32> to vector<16x32xf32>
    %68 = arith.subf %53, %67 : vector<16x32xf32>
    %cst_21 = arith.constant 9.99999974E-6 : f32
    %69 = vector.broadcast %cst_21 : f32 to vector<16x1xf32>
    %70 = arith.addf %66, %69 : vector<16x1xf32>
    %71 = math.rsqrt %70 : vector<16x1xf32>
    %72 = vector.broadcast %71 : vector<16x1xf32> to vector<16x32xf32>
    %73 = arith.mulf %68, %72 : vector<16x32xf32>
    %74 = vector.broadcast %54 : vector<1x32xf32> to vector<16x32xf32>
    %75 = arith.mulf %73, %74 : vector<16x32xf32>
    %76 = vector.broadcast %55 : vector<1x32xf32> to vector<16x32xf32>
    %77 = arith.addf %75, %76 : vector<16x32xf32>
    %78 = arith.truncf %77 : vector<16x32xf32> to vector<16x32xbf16>
    %c0_22 = arith.constant 0 : index
    %c0_23 = arith.constant 0 : index
    %79 = vector.load %arg6[%c0_22, %c0_23] : memref<32x64xbf16, #tpu.memory_space<vmem>>, vector<32x64xbf16>
    %cst_24 = arith.constant dense<0.000000e+00> : vector<16x64xf32>
    %80 = tpu.matmul %78, %79, %cst_24 {dimension_numbers = #tpu.dot_dimension_numbers<[1], [0], [0], [1], [0, 0, 1, 1], [], []>} : vector<16x32xbf16>, vector<32x64xbf16>, vector<16x64xf32> -> vector<16x64xf32>
    %c0_25 = arith.constant 0 : index
    %c0_26 = arith.constant 0 : index
    %81 = vector.load %arg7[%c0_25, %c0_26] : memref<1x64xf32, #tpu.memory_space<vmem>>, vector<1x64xf32>
    %82 = vector.broadcast %81 : vector<1x64xf32> to vector<16x64xf32>
    %83 = arith.addf %80, %82 : vector<16x64xf32>
    %cst_27 = arith.constant 0.000000e+00 : f32
    %84 = vector.broadcast %cst_27 : f32 to vector<16x64xf32>
    %85 = arith.maximumf %83, %84 : vector<16x64xf32>
    %86 = arith.truncf %85 : vector<16x64xf32> to vector<16x64xbf16>
    %c0_28 = arith.constant 0 : index
    %c0_29 = arith.constant 0 : index
    %87 = vector.load %arg8[%c0_28, %c0_29] : memref<64x32xbf16, #tpu.memory_space<vmem>>, vector<64x32xbf16>
    %cst_30 = arith.constant dense<0.000000e+00> : vector<16x32xf32>
    %88 = tpu.matmul %86, %87, %cst_30 {dimension_numbers = #tpu.dot_dimension_numbers<[1], [0], [0], [1], [0, 0, 1, 1], [], []>} : vector<16x64xbf16>, vector<64x32xbf16>, vector<16x32xf32> -> vector<16x32xf32>
    %c0_31 = arith.constant 0 : index
    %c0_32 = arith.constant 0 : index
    %89 = vector.load %arg9[%c0_31, %c0_32] : memref<1x32xf32, #tpu.memory_space<vmem>>, vector<1x32xf32>
    %90 = vector.broadcast %89 : vector<1x32xf32> to vector<16x32xf32>
    %91 = arith.addf %88, %90 : vector<16x32xf32>
    %92 = arith.addf %77, %91 : vector<16x32xf32>
    %c0_33 = arith.constant 0 : index
    %c0_34 = arith.constant 0 : index
    %93 = vector.load %arg10[%c0_33, %c0_34] : memref<1x32xf32, #tpu.memory_space<vmem>>, vector<1x32xf32>
    %c0_35 = arith.constant 0 : index
    %c0_36 = arith.constant 0 : index
    %94 = vector.load %arg11[%c0_35, %c0_36] : memref<1x32xf32, #tpu.memory_space<vmem>>, vector<1x32xf32>
    %cst_37 = arith.constant dense<0.000000e+00> : vector<16xf32>
    %95 = vector.multi_reduction <add>, %92, %cst_37 [1] : vector<16x32xf32> to vector<16xf32>
    %96 = vector.shape_cast %95 : vector<16xf32> to vector<16x1xf32>
    %cst_38 = arith.constant 3.200000e+01 : f32
    %97 = vector.broadcast %cst_38 : f32 to vector<16x1xf32>
    %98 = arith.divf %96, %97 : vector<16x1xf32>
    %99 = vector.broadcast %98 : vector<16x1xf32> to vector<16x32xf32>
    %100 = arith.subf %92, %99 : vector<16x32xf32>
    %101 = arith.mulf %100, %100 : vector<16x32xf32>
    %cst_39 = arith.constant dense<0.000000e+00> : vector<16xf32>
    %102 = vector.multi_reduction <add>, %101, %cst_39 [1] : vector<16x32xf32> to vector<16xf32>
    %103 = vector.shape_cast %102 : vector<16xf32> to vector<16x1xf32>
    %cst_40 = arith.constant 3.200000e+01 : f32
    %104 = vector.broadcast %cst_40 : f32 to vector<16x1xf32>
    %105 = arith.divf %103, %104 : vector<16x1xf32>
    %106 = vector.broadcast %98 : vector<16x1xf32> to vector<16x32xf32>
    %107 = arith.subf %92, %106 : vector<16x32xf32>
    %cst_41 = arith.constant 9.99999974E-6 : f32
    %108 = vector.broadcast %cst_41 : f32 to vector<16x1xf32>
    %109 = arith.addf %105, %108 : vector<16x1xf32>
    %110 = math.rsqrt %109 : vector<16x1xf32>
    %111 = vector.broadcast %110 : vector<16x1xf32> to vector<16x32xf32>
    %112 = arith.mulf %107, %111 : vector<16x32xf32>
    %113 = vector.broadcast %93 : vector<1x32xf32> to vector<16x32xf32>
    %114 = arith.mulf %112, %113 : vector<16x32xf32>
    %115 = vector.broadcast %94 : vector<1x32xf32> to vector<16x32xf32>
    %116 = arith.addf %114, %115 : vector<16x32xf32>
    %117 = vector.shape_cast %116 : vector<16x32xf32> to vector<2x8x32xf32>
    %c0_42 = arith.constant 0 : index
    %c0_43 = arith.constant 0 : index
    %c0_44 = arith.constant 0 : index
    %118 = vector.load %arg12[%c0_42, %c0_43, %c0_44] : memref<2x8x32xf32, #tpu.memory_space<vmem>>, vector<2x8x32xf32>
    tpu.vector_store %arg12[%c0_42, %c0_43, %c0_44], %117 {strides = array<i32>} : memref<2x8x32xf32, #tpu.memory_space<vmem>>, vector<2x8x32xf32>,
    return
  }
  func.func @transform_0(%arg0: i32) -> (i32, i32, i32) {
    %c0_i32 = arith.constant 0 : i32
    %c0_i32_0 = arith.constant 0 : i32
    %c0_i32_1 = arith.constant 0 : i32
    return %arg0, %c0_i32, %c0_i32_0 : i32, i32, i32
  }
  func.func @transform_1(%arg0: i32) -> (i32, i32) {
    %c0_i32 = arith.constant 0 : i32
    %c0_i32_0 = arith.constant 0 : i32
    %c0_i32_1 = arith.constant 0 : i32
    return %c0_i32, %c0_i32_0 : i32, i32
  }
  func.func @transform_2(%arg0: i32) -> (i32, i32, i32) {
    %c0_i32 = arith.constant 0 : i32
    %c0_i32_0 = arith.constant 0 : i32
    %c0_i32_1 = arith.constant 0 : i32
    %c0_i32_2 = arith.constant 0 : i32
    return %c0_i32, %c0_i32_0, %c0_i32_1 : i32, i32, i32
  }
  func.func @transform_3(%arg0: i32) -> (i32, i32) {
    %c0_i32 = arith.constant 0 : i32
    %c0_i32_0 = arith.constant 0 : i32
    %c0_i32_1 = arith.constant 0 : i32
    return %c0_i32, %c0_i32_0 : i32, i32
  }
  func.func @transform_4(%arg0: i32) -> (i32, i32) {
    %c0_i32 = arith.constant 0 : i32
    %c0_i32_0 = arith.constant 0 : i32
    %c0_i32_1 = arith.constant 0 : i32
    return %c0_i32, %c0_i32_0 : i32, i32
  }
  func.func @transform_5(%arg0: i32) -> (i32, i32) {
    %c0_i32 = arith.constant 0 : i32
    %c0_i32_0 = arith.constant 0 : i32
    %c0_i32_1 = arith.constant 0 : i32
    return %c0_i32, %c0_i32_0 : i32, i32
  }
  func.func @transform_6(%arg0: i32) -> (i32, i32) {
    %c0_i32 = arith.constant 0 : i32
    %c0_i32_0 = arith.constant 0 : i32
    %c0_i32_1 = arith.constant 0 : i32
    return %c0_i32, %c0_i32_0 : i32, i32
  }
  func.func @transform_7(%arg0: i32) -> (i32, i32) {
    %c0_i32 = arith.constant 0 : i32
    %c0_i32_0 = arith.constant 0 : i32
    %c0_i32_1 = arith.constant 0 : i32
    return %c0_i32, %c0_i32_0 : i32, i32
  }
  func.func @transform_8(%arg0: i32) -> (i32, i32) {
    %c0_i32 = arith.constant 0 : i32
    %c0_i32_0 = arith.constant 0 : i32
    %c0_i32_1 = arith.constant 0 : i32
    return %c0_i32, %c0_i32_0 : i32, i32
  }
  func.func @transform_9(%arg0: i32) -> (i32, i32) {
    %c0_i32 = arith.constant 0 : i32
    %c0_i32_0 = arith.constant 0 : i32
    %c0_i32_1 = arith.constant 0 : i32
    return %c0_i32, %c0_i32_0 : i32, i32
  }
  func.func @transform_10(%arg0: i32) -> (i32, i32) {
    %c0_i32 = arith.constant 0 : i32
    %c0_i32_0 = arith.constant 0 : i32
    %c0_i32_1 = arith.constant 0 : i32
    return %c0_i32, %c0_i32_0 : i32, i32
  }
  func.func @transform_11(%arg0: i32) -> (i32, i32, i32) {
    %c0_i32 = arith.constant 0 : i32
    %c0_i32_0 = arith.constant 0 : i32
    %c0_i32_1 = arith.constant 0 : i32
    return %arg0, %c0_i32, %c0_i32_0 : i32, i32, i32
  }
}

</mosaic_0001>

<llo_original>
// kernel: tpu_custom_call.1
$region0: #{tpu_custom_call.1}
  #allocation0 [shape = 'u32[]', space=smem, size = 0x4, offset = 0x4, fixed_abs, tag = 'smem constant byte address 0x4 - core index']
  #allocation1 [shape = 'u32[144,128]{1,0:T(1,128)}', space=vmem, size = 0x12000, scoped, tag = 'internal scratch']
  %s0 = inlined_call_operand.hbm [shape: f32[4,8,32], index: 0, kind: input, shape index: {}]
  %s1 = inlined_call_operand.hbm [shape: bf16[32,96], index: 1, kind: input, shape index: {}]
  %s2 = inlined_call_operand.hbm [shape: bf16[4,8,32], index: 2, kind: input, shape index: {}]
  %s3 = inlined_call_operand.hbm [shape: f32[1,32], index: 3, kind: input, shape index: {}]
  %s4 = inlined_call_operand.hbm [shape: f32[1,32], index: 4, kind: input, shape index: {}]
  %s5 = inlined_call_operand.hbm [shape: bf16[32,64], index: 5, kind: input, shape index: {}]
  %s6 = inlined_call_operand.hbm [shape: f32[1,64], index: 6, kind: input, shape index: {}]
  %s7 = inlined_call_operand.hbm [shape: bf16[64,32], index: 7, kind: input, shape index: {}]
  %s8 = inlined_call_operand.hbm [shape: f32[1,32], index: 8, kind: input, shape index: {}]
  %s9 = inlined_call_operand.hbm [shape: f32[1,32], index: 9, kind: input, shape index: {}]
  %s10 = inlined_call_operand.hbm [shape: f32[1,32], index: 10, kind: input, shape index: {}]
  %s11 = inlined_call_operand.hbm [shape: f32[4,8,32], index: 11, kind: output, shape index: {}]
  %s12 = sld [smem:[#allocation0]]
  $region121: #{tpu_custom_call.1} parent=0
    _
  %s14 = ssub.s32 1, %s12
  %s15 = scalar_select 0, %s14, %s12
  $region1: #{tpu_custom_call.1} parent=0
    #allocation2 [shape = 'u8[16384]{0}', space=vmem, size = 0x4000, scoped, tag = 'input window, operand 0']
    #allocation3 [shape = 's32[2]{0}', space=sflag, size = 0x8, scoped, tag = 'scoped memory for tpu_custom_call.1']
    #allocation4 [shape = 's32[2]{0}', space=sflag, size = 0x8, scoped, tag = 'scoped memory for tpu_custom_call.1']
    #allocation5 [shape = 'u8[8192]{0}', space=vmem, size = 0x2000, scoped, tag = 'input window, operand 1, single buffered']
    #allocation6 [shape = 's32[1]{0}', space=sflag, size = 0x4, scoped, tag = 'scoped memory for tpu_custom_call.1']
    #allocation7 [shape = 'u8[8192]{0}', space=vmem, size = 0x2000, scoped, tag = 'input window, operand 2, single buffered']
    #allocation8 [shape = 'u8[512]{0}', space=vmem, size = 0x400, scoped, tag = 'input window, operand 3, single buffered']
    #allocation9 [shape = 's32[1]{0}', space=sflag, size = 0x4, scoped, tag = 'scoped memory for tpu_custom_call.1']
    #allocation10 [shape = 'u8[512]{0}', space=vmem, size = 0x400, scoped, tag = 'input window, operand 4, single buffered']
    #allocation11 [shape = 'u8[8192]{0}', space=vmem, size = 0x2000, scoped, tag = 'input window, operand 5, single buffered']
    #allocation12 [shape = 's32[1]{0}', space=sflag, size = 0x4, scoped, tag = 'scoped memory for tpu_custom_call.1']
    #allocation13 [shape = 'u8[512]{0}', space=vmem, size = 0x400, scoped, tag = 'input window, operand 6, single buffered']
    #allocation14 [shape = 'u8[16384]{0}', space=vmem, size = 0x4000, scoped, tag = 'input window, operand 7, single buffered']
    #allocation15 [shape = 's32[1]{0}', space=sflag, size = 0x4, scoped, tag = 'scoped memory for tpu_custom_call.1']
    #allocation16 [shape = 'u8[512]{0}', space=vmem, size = 0x400, scoped, tag = 'input window, operand 8, single buffered']
    #allocation17 [shape = 'u8[512]{0}', space=vmem, size = 0x400, scoped, tag = 'input window, operand 9, single buffered']
    #allocation18 [shape = 's32[1]{0}', space=sflag, size = 0x4, scoped, tag = 'scoped memory for tpu_custom_call.1']
    #allocation19 [shape = 'u8[512]{0}', space=vmem, size = 0x400, scoped, tag = 'input window, operand 10, single buffered']
    #allocation20 [shape = 'u8[16384]{0}', space=vmem, size = 0x4000, scoped, tag = 'output window, operand 0']
    %16 = vsyncpa [#allocation3], 0
    %s17 = scalar_lea.sflag [#allocation3], 1
    %18 = vsyncpa %s17, 0
    %19 = vsyncpa [#allocation6], 0
    %20 = vsyncpa [#allocation9], 0
    %21 = vsyncpa [#allocation12], 0
    %22 = vsyncpa [#allocation15], 0
    %23 = vsyncpa [#allocation18], 0
    %24 = vsyncpa [#allocation4], 0
    %s25 = scalar_lea.sflag [#allocation4], 1
    %26 = vsyncpa %s25, 0
    loop: start=0, step=1, limit=4
    $region2: #{tpu_custom_call.1} parent=1 // loop_pre_header
      _
    $region3: #{tpu_custom_call.1} parent=1 // loop_header
      %s28 = sphi 0, %s32
      %p29 = scmp.ge.s32.totalorder %s28, 4
      %s38 = sphi 0, %s40
      %s41 = sphi 0, %s38
      %s42 = sphi 0, %s41
      %s58 = sphi 0, %s42
      %s62 = sphi 0, %s62
      %s64 = sphi 0, %s62
      %s65 = sphi 0, %s64
      %s79 = sphi 0, %s65
      %s83 = sphi 0, %s83
      %s85 = sphi 0, %s83
      %s86 = sphi 0, %s85
      %s100 = sphi 0, %s86
      %s104 = sphi 0, %s104
      %s106 = sphi 0, %s104
      %s107 = sphi 0, %s106
      %s121 = sphi 0, %s107
      %s125 = sphi 0, %s125
      %s127 = sphi 0, %s125
      %s128 = sphi 0, %s127
      %s142 = sphi 0, %s128
      %s146 = sphi 0, %s146
      %s148 = sphi 0, %s146
      %s149 = sphi 0, %s148
      %s163 = sphi 0, %s149
      %s167 = sphi 0, %s167
      %s169 = sphi 0, %s167
      %s170 = sphi 0, %s169
      %s184 = sphi 0, %s170
      %s188 = sphi 0, %s188
      %s190 = sphi 0, %s188
      %s191 = sphi 0, %s190
      %s205 = sphi 0, %s191
      %s209 = sphi 0, %s209
      %s211 = sphi 0, %s209
      %s212 = sphi 0, %s211
      %s226 = sphi 0, %s212
      %s230 = sphi 0, %s230
      %s232 = sphi 0, %s230
      %s233 = sphi 0, %s232
      %s247 = sphi 0, %s233
      %s251 = sphi 0, %s251
      %s253 = sphi 0, %s251
      %s254 = sphi 0, %s253
      %s268 = sphi 0, %s254
      %s274 = sphi 0, %s276
      %s277 = sphi 0, %s274
      %s278 = sphi 0, %s277
      %s294 = sphi 0, %s278
    $region4: #{tpu_custom_call.1} parent=1 // loop_header_branch
      %31 = sbr.rel (%p29) target = $region8
    $region5: #{tpu_custom_call.1} parent=1 // loop_body
      %s33 = ssub.s32 %s28, 1
      %s34 = ssub.s32 %s28, 2
      %s35 = sadd.s32 %s28, 1
      %s36 = ssub.s32 %s28, %s35
      %p37 = scmp.eq.s32.totalorder %s36, 0
      %s39 = sadd.s32 %s38, 1
      %s40 = scalar_select %p37, %s38, %s39
      %p43 = pneg %p37
      %p44 = scmp.eq.s32.totalorder %s28, 1
      %p45 = por %p43, %p44
      %p46 = scmp.ne.s32.totalorder %s38, %s41
      %p47 = scmp.eq.s32.totalorder %s28, 0
      %p48 = por %p46, %p47
      %p49 = scmp.ne.s32.totalorder %s38, %s41
      %p50 = scmp.eq.s32.totalorder %s33, 1
      %p51 = por %p49, %p50
      %p52 = scmp.ne.s32.totalorder %s41, %s42
      %p53 = scmp.eq.s32.totalorder %s33, 0
      %p54 = por %p52, %p53
      %p55 = scmp.ne.s32.totalorder %s41, %s42
      %p56 = scmp.eq.s32.totalorder %s34, 1
      %p57 = por %p55, %p56
      %p59 = scmp.ne.s32.totalorder %s42, %s58
      %p60 = scmp.eq.s32.totalorder %s34, 0
      %p61 = por %p59, %p60
      %s63 = sadd.s32 %s62, 1
      %p66 = scmp.eq.s32.totalorder %s28, 1
      %p67 = scmp.ne.s32.totalorder %s62, %s64
      %p68 = scmp.eq.s32.totalorder %s28, 0
      %p69 = por %p67, %p68
      %p70 = scmp.ne.s32.totalorder %s62, %s64
      %p71 = scmp.eq.s32.totalorder %s33, 1
      %p72 = por %p70, %p71
      %p73 = scmp.ne.s32.totalorder %s64, %s65
      %p74 = scmp.eq.s32.totalorder %s33, 0
      %p75 = por %p73, %p74
      %p76 = scmp.ne.s32.totalorder %s64, %s65
      %p77 = scmp.eq.s32.totalorder %s34, 1
      %p78 = por %p76, %p77
      %p80 = scmp.ne.s32.totalorder %s65, %s79
      %p81 = scmp.eq.s32.totalorder %s34, 0
      %p82 = por %p80, %p81
      %s84 = sadd.s32 %s83, 1
      %p87 = scmp.eq.s32.totalorder %s28, 1
      %p88 = scmp.ne.s32.totalorder %s83, %s85
      %p89 = scmp.eq.s32.totalorder %s28, 0
      %p90 = por %p88, %p89
      %p91 = scmp.ne.s32.totalorder %s83, %s85
      %p92 = scmp.eq.s32.totalorder %s33, 1
      %p93 = por %p91, %p92
      %p94 = scmp.ne.s32.totalorder %s85, %s86
      %p95 = scmp.eq.s32.totalorder %s33, 0
      %p96 = por %p94, %p95
      %p97 = scmp.ne.s32.totalorder %s85, %s86
      %p98 = scmp.eq.s32.totalorder %s34, 1
      %p99 = por %p97, %p98
      %p101 = scmp.ne.s32.totalorder %s86, %s100
      %p102 = scmp.eq.s32.totalorder %s34, 0
      %p103 = por %p101, %p102
      %s105 = sadd.s32 %s104, 1
      %p108 = scmp.eq.s32.totalorder %s28, 1
      %p109 = scmp.ne.s32.totalorder %s104, %s106
      %p110 = scmp.eq.s32.totalorder %s28, 0
      %p111 = por %p109, %p110
      %p112 = scmp.ne.s32.totalorder %s104, %s106
      %p113 = scmp.eq.s32.totalorder %s33, 1
      %p114 = por %p112, %p113
      %p115 = scmp.ne.s32.totalorder %s106, %s107
      %p116 = scmp.eq.s32.totalorder %s33, 0
      %p117 = por %p115, %p116
      %p118 = scmp.ne.s32.totalorder %s106, %s107
      %p119 = scmp.eq.s32.totalorder %s34, 1
      %p120 = por %p118, %p119
      %p122 = scmp.ne.s32.totalorder %s107, %s121
      %p123 = scmp.eq.s32.totalorder %s34, 0
      %p124 = por %p122, %p123
      %s126 = sadd.s32 %s125, 1
      %p129 = scmp.eq.s32.totalorder %s28, 1
      %p130 = scmp.ne.s32.totalorder %s125, %s127
      %p131 = scmp.eq.s32.totalorder %s28, 0
      %p132 = por %p130, %p131
      %p133 = scmp.ne.s32.totalorder %s125, %s127
      %p134 = scmp.eq.s32.totalorder %s33, 1
      %p135 = por %p133, %p134
      %p136 = scmp.ne.s32.totalorder %s127, %s128
      %p137 = scmp.eq.s32.totalorder %s33, 0
      %p138 = por %p136, %p137
      %p139 = scmp.ne.s32.totalorder %s127, %s128
      %p140 = scmp.eq.s32.totalorder %s34, 1
      %p141 = por %p139, %p140
      %p143 = scmp.ne.s32.totalorder %s128, %s142
      %p144 = scmp.eq.s32.totalorder %s34, 0
      %p145 = por %p143, %p144
      %s147 = sadd.s32 %s146, 1
      %p150 = scmp.eq.s32.totalorder %s28, 1
      %p151 = scmp.ne.s32.totalorder %s146, %s148
      %p152 = scmp.eq.s32.totalorder %s28, 0
      %p153 = por %p151, %p152
      %p154 = scmp.ne.s32.totalorder %s146, %s148
      %p155 = scmp.eq.s32.totalorder %s33, 1
      %p156 = por %p154, %p155
      %p157 = scmp.ne.s32.totalorder %s148, %s149
      %p158 = scmp.eq.s32.totalorder %s33, 0
      %p159 = por %p157, %p158
      %p160 = scmp.ne.s32.totalorder %s148, %s149
      %p161 = scmp.eq.s32.totalorder %s34, 1
      %p162 = por %p160, %p161
      %p164 = scmp.ne.s32.totalorder %s149, %s163
      %p165 = scmp.eq.s32.totalorder %s34, 0
      %p166 = por %p164, %p165
      %s168 = sadd.s32 %s167, 1
      %p171 = scmp.eq.s32.totalorder %s28, 1
      %p172 = scmp.ne.s32.totalorder %s167, %s169
      %p173 = scmp.eq.s32.totalorder %s28, 0
      %p174 = por %p172, %p173
      %p175 = scmp.ne.s32.totalorder %s167, %s169
      %p176 = scmp.eq.s32.totalorder %s33, 1
      %p177 = por %p175, %p176
      %p178 = scmp.ne.s32.totalorder %s169, %s170
      %p179 = scmp.eq.s32.totalorder %s33, 0
      %p180 = por %p178, %p179
      %p181 = scmp.ne.s32.totalorder %s169, %s170
      %p182 = scmp.eq.s32.totalorder %s34, 1
      %p183 = por %p181, %p182
      %p185 = scmp.ne.s32.totalorder %s170, %s184
      %p186 = scmp.eq.s32.totalorder %s34, 0
      %p187 = por %p185, %p186
      %s189 = sadd.s32 %s188, 1
      %p192 = scmp.eq.s32.totalorder %s28, 1
      %p193 = scmp.ne.s32.totalorder %s188, %s190
      %p194 = scmp.eq.s32.totalorder %s28, 0
      %p195 = por %p193, %p194
      %p196 = scmp.ne.s32.totalorder %s188, %s190
      %p197 = scmp.eq.s32.totalorder %s33, 1
      %p198 = por %p196, %p197
      %p199 = scmp.ne.s32.totalorder %s190, %s191
      %p200 = scmp.eq.s32.totalorder %s33, 0
      %p201 = por %p199, %p200
      %p202 = scmp.ne.s32.totalorder %s190, %s191
      %p203 = scmp.eq.s32.totalorder %s34, 1
      %p204 = por %p202, %p203
      %p206 = scmp.ne.s32.totalorder %s191, %s205
      %p207 = scmp.eq.s32.totalorder %s34, 0
      %p208 = por %p206, %p207
      %s210 = sadd.s32 %s209, 1
      %p213 = scmp.eq.s32.totalorder %s28, 1
      %p214 = scmp.ne.s32.totalorder %s209, %s211
      %p215 = scmp.eq.s32.totalorder %s28, 0
      %p216 = por %p214, %p215
      %p217 = scmp.ne.s32.totalorder %s209, %s211
      %p218 = scmp.eq.s32.totalorder %s33, 1
      %p219 = por %p217, %p218
      %p220 = scmp.ne.s32.totalorder %s211, %s212
      %p221 = scmp.eq.s32.totalorder %s33, 0
      %p222 = por %p220, %p221
      %p223 = scmp.ne.s32.totalorder %s211, %s212
      %p224 = scmp.eq.s32.totalorder %s34, 1
      %p225 = por %p223, %p224
      %p227 = scmp.ne.s32.totalorder %s212, %s226
      %p228 = scmp.eq.s32.totalorder %s34, 0
      %p229 = por %p227, %p228
      %s231 = sadd.s32 %s230, 1
      %p234 = scmp.eq.s32.totalorder %s28, 1
      %p235 = scmp.ne.s32.totalorder %s230, %s232
      %p236 = scmp.eq.s32.totalorder %s28, 0
      %p237 = por %p235, %p236
      %p238 = scmp.ne.s32.totalorder %s230, %s232
      %p239 = scmp.eq.s32.totalorder %s33, 1
      %p240 = por %p238, %p239
      %p241 = scmp.ne.s32.totalorder %s232, %s233
      %p242 = scmp.eq.s32.totalorder %s33, 0
      %p243 = por %p241, %p242
      %p244 = scmp.ne.s32.totalorder %s232, %s233
      %p245 = scmp.eq.s32.totalorder %s34, 1
      %p246 = por %p244, %p245
      %p248 = scmp.ne.s32.totalorder %s233, %s247
      %p249 = scmp.eq.s32.totalorder %s34, 0
      %p250 = por %p248, %p249
      %s252 = sadd.s32 %s251, 1
      %p255 = scmp.eq.s32.totalorder %s28, 1
      %p256 = scmp.ne.s32.totalorder %s251, %s253
      %p257 = scmp.eq.s32.totalorder %s28, 0
      %p258 = por %p256, %p257
      %p259 = scmp.ne.s32.totalorder %s251, %s253
      %p260 = scmp.eq.s32.totalorder %s33, 1
      %p261 = por %p259, %p260
      %p262 = scmp.ne.s32.totalorder %s253, %s254
      %p263 = scmp.eq.s32.totalorder %s33, 0
      %p264 = por %p262, %p263
      %p265 = scmp.ne.s32.totalorder %s253, %s254
      %p266 = scmp.eq.s32.totalorder %s34, 1
      %p267 = por %p265, %p266
      %p269 = scmp.ne.s32.totalorder %s254, %s268
      %p270 = scmp.eq.s32.totalorder %s34, 0
      %p271 = por %p269, %p270
      %s272 = ssub.s32 %s28, %s35
      %p273 = scmp.eq.s32.totalorder %s272, 0
      %s275 = sadd.s32 %s274, 1
      %s276 = scalar_select %p273, %s274, %s275
      %p279 = pneg %p273
      %p280 = scmp.eq.s32.totalorder %s28, 1
      %p281 = por %p279, %p280
      %p282 = scmp.ne.s32.totalorder %s274, %s277
      %p283 = scmp.eq.s32.totalorder %s28, 0
      %p284 = por %p282, %p283
      %p285 = scmp.ne.s32.totalorder %s274, %s277
      %p286 = scmp.eq.s32.totalorder %s33, 1
      %p287 = por %p285, %p286
      %p288 = scmp.ne.s32.totalorder %s277, %s278
      %p289 = scmp.eq.s32.totalorder %s33, 0
      %p290 = por %p288, %p289
      %p291 = scmp.ne.s32.totalorder %s277, %s278
      %p292 = scmp.eq.s32.totalorder %s34, 1
      %p293 = por %p291, %p292
      %p295 = scmp.ne.s32.totalorder %s278, %s294
      %p296 = scmp.eq.s32.totalorder %s34, 0
      %p297 = por %p295, %p296
      %p298 = scmp.le.s32.totalorder 1, %s28
      %p299 = scmp.lt.s32.totalorder %s28, 3
      %p300 = pnand %p298, %p299
      %p301 = pneg %p300
      // Predicated region
      $region9: #{tpu_custom_call.1} parent=5 // pred_check
        _
      $region10: #{tpu_custom_call.1} parent=5 // pred_check_branch
        %303 = sbr.rel (%p300) target = $region12
      $region11: #{tpu_custom_call.1} parent=5 // pred_region
        %s304 = ssub.s32 %s28, 1
        // Predicated region
        $region13: #{tpu_custom_call.1} parent=11 // pred_check
          %p305 = pneg %p75
        $region14: #{tpu_custom_call.1} parent=11 // pred_check_branch
          %307 = sbr.rel (%p305) target = $region16
        $region15: #{tpu_custom_call.1} parent=11 // pred_region
          %s309 = ssub.s32 256, 256
          %310 = vsyncadd [#allocation6], %s309
          %s311 = sshll.u32 [#allocation5], 4
          %s312 = int_to_ptr.vmem [resolvable:$true] %s311
          %317 = dma.hbm_to_vmem [thread:$0]  %s1, 256, %s312, [#allocation6], 64, 64, 4
        $region16: #{tpu_custom_call.1} parent=11 // pred_fallthru
          _
        // Predicated region
        $region17: #{tpu_custom_call.1} parent=11 // pred_check
          %p318 = pneg %p96
        $region18: #{tpu_custom_call.1} parent=11 // pred_check_branch
          %320 = sbr.rel (%p318) target = $region20
        $region19: #{tpu_custom_call.1} parent=11 // pred_region
          %s322 = ssub.s32 256, 256
          %323 = vsyncadd [#allocation6], %s322
          %s324 = sshll.u32 [#allocation7], 4
          %s325 = int_to_ptr.vmem [resolvable:$true] %s324
          %330 = dma.hbm_to_vmem [thread:$0]  %s2, 256, %s325, [#allocation6], 64, 64, 4
        $region20: #{tpu_custom_call.1} parent=11 // pred_fallthru
          _
        // Predicated region
        $region21: #{tpu_custom_call.1} parent=11 // pred_check
          %p331 = pneg %p117
        $region22: #{tpu_custom_call.1} parent=11 // pred_check_branch
          %333 = sbr.rel (%p331) target = $region24
        $region23: #{tpu_custom_call.1} parent=11 // pred_region
          %s335 = ssub.s32 16, 16
          %336 = vsyncadd [#allocation9], %s335
          %s338 = sshll.u32 [#allocation8], 4
          %s339 = int_to_ptr.vmem [resolvable:$true] %s338
          %341 = dma.hbm_to_vmem [thread:$0]  %s3, 16, %s339, [#allocation9]
        $region24: #{tpu_custom_call.1} parent=11 // pred_fallthru
          _
        // Predicated region
        $region25: #{tpu_custom_call.1} parent=11 // pred_check
          %p342 = pneg %p138
        $region26: #{tpu_custom_call.1} parent=11 // pred_check_branch
          %344 = sbr.rel (%p342) target = $region28
        $region27: #{tpu_custom_call.1} parent=11 // pred_region
          %s346 = ssub.s32 16, 16
          %347 = vsyncadd [#allocation9], %s346
          %s349 = sshll.u32 [#allocation10], 4
          %s350 = int_to_ptr.vmem [resolvable:$true] %s349
          %352 = dma.hbm_to_vmem [thread:$0]  %s4, 16, %s350, [#allocation9]
        $region28: #{tpu_custom_call.1} parent=11 // pred_fallthru
          _
        // Predicated region
        $region29: #{tpu_custom_call.1} parent=11 // pred_check
          %p353 = pneg %p159
        $region30: #{tpu_custom_call.1} parent=11 // pred_check_branch
          %355 = sbr.rel (%p353) target = $region32
        $region31: #{tpu_custom_call.1} parent=11 // pred_region
          %s357 = ssub.s32 256, 256
          %358 = vsyncadd [#allocation12], %s357
          %s359 = sshll.u32 [#allocation11], 4
          %s360 = int_to_ptr.vmem [resolvable:$true] %s359
          %365 = dma.hbm_to_vmem [thread:$0]  %s5, 256, %s360, [#allocation12], 64, 64, 4
        $region32: #{tpu_custom_call.1} parent=11 // pred_fallthru
          _
        // Predicated region
        $region33: #{tpu_custom_call.1} parent=11 // pred_check
          %p366 = pneg %p180
        $region34: #{tpu_custom_call.1} parent=11 // pred_check_branch
          %368 = sbr.rel (%p366) target = $region36
        $region35: #{tpu_custom_call.1} parent=11 // pred_region
          %s370 = ssub.s32 16, 16
          %371 = vsyncadd [#allocation12], %s370
          %s373 = sshll.u32 [#allocation13], 4
          %s374 = int_to_ptr.vmem [resolvable:$true] %s373
          %376 = dma.hbm_to_vmem [thread:$0]  %s6, 16, %s374, [#allocation12]
        $region36: #{tpu_custom_call.1} parent=11 // pred_fallthru
          _
        // Predicated region
        $region37: #{tpu_custom_call.1} parent=11 // pred_check
          %p377 = pneg %p201
        $region38: #{tpu_custom_call.1} parent=11 // pred_check_branch
          %379 = sbr.rel (%p377) target = $region40
        $region39: #{tpu_custom_call.1} parent=11 // pred_region
          %s381 = ssub.s32 512, 512
          %382 = vsyncadd [#allocation15], %s381
          %s383 = sshll.u32 [#allocation14], 4
          %s384 = int_to_ptr.vmem [resolvable:$true] %s383
          %389 = dma.hbm_to_vmem [thread:$0]  %s7, 512, %s384, [#allocation15], 64, 64, 4
        $region40: #{tpu_custom_call.1} parent=11 // pred_fallthru
          _
        // Predicated region
        $region41: #{tpu_custom_call.1} parent=11 // pred_check
          %p390 = pneg %p222
        $region42: #{tpu_custom_call.1} parent=11 // pred_check_branch
          %392 = sbr.rel (%p390) target = $region44
        $region43: #{tpu_custom_call.1} parent=11 // pred_region
          %s394 = ssub.s32 16, 16
          %395 = vsyncadd [#allocation15], %s394
          %s397 = sshll.u32 [#allocation16], 4
          %s398 = int_to_ptr.vmem [resolvable:$true] %s397
          %400 = dma.hbm_to_vmem [thread:$0]  %s8, 16, %s398, [#allocation15]
        $region44: #{tpu_custom_call.1} parent=11 // pred_fallthru
          _
        // Predicated region
        $region45: #{tpu_custom_call.1} parent=11 // pred_check
          %p401 = pneg %p243
        $region46: #{tpu_custom_call.1} parent=11 // pred_check_branch
          %403 = sbr.rel (%p401) target = $region48
        $region47: #{tpu_custom_call.1} parent=11 // pred_region
          %s405 = ssub.s32 16, 16
          %406 = vsyncadd [#allocation18], %s405
          %s408 = sshll.u32 [#allocation17], 4
          %s409 = int_to_ptr.vmem [resolvable:$true] %s408
          %411 = dma.hbm_to_vmem [thread:$0]  %s9, 16, %s409, [#allocation18]
        $region48: #{tpu_custom_call.1} parent=11 // pred_fallthru
          _
        // Predicated region
        $region49: #{tpu_custom_call.1} parent=11 // pred_check
          %p412 = pneg %p264
        $region50: #{tpu_custom_call.1} parent=11 // pred_check_branch
          %414 = sbr.rel (%p412) target = $region52
        $region51: #{tpu_custom_call.1} parent=11 // pred_region
          %s416 = ssub.s32 16, 16
          %417 = vsyncadd [#allocation18], %s416
          %s419 = sshll.u32 [#allocation19], 4
          %s420 = int_to_ptr.vmem [resolvable:$true] %s419
          %422 = dma.hbm_to_vmem [thread:$0]  %s10, 16, %s420, [#allocation18]
        $region52: #{tpu_custom_call.1} parent=11 // pred_fallthru
          _
      $region12: #{tpu_custom_call.1} parent=5 // pred_fallthru
        _
      %p423 = scmp.lt.s32.totalorder %s28, 2
      // Predicated region
      $region53: #{tpu_custom_call.1} parent=5 // pred_check
        %p424 = pneg %p423
      $region54: #{tpu_custom_call.1} parent=5 // pred_check_branch
        %426 = sbr.rel (%p424) target = $region56
      $region55: #{tpu_custom_call.1} parent=5 // pred_region
        // Predicated region
        $region57: #{tpu_custom_call.1} parent=55 // pred_check
          %p427 = pneg %p48
        $region58: #{tpu_custom_call.1} parent=55 // pred_check_branch
          %429 = sbr.rel (%p427) target = $region60
        $region59: #{tpu_custom_call.1} parent=55 // pred_region
          %s430 = sand.u32 %s38, 1
          %s431 = scalar_lea.sflag [#allocation3], %s430
          %s432 = sand.u32 %s38, 1
          %s433 = smul.addr %s432, 16
          %s434 = scalar_lea.vmem [#allocation2], %s433
          %s435 = smul.u32 2, %s28
          %s437 = ssub.s32 256, 256
          %438 = vsyncadd %s431, %s437
          %s439 = smul.addr %s435, 128
          %s440 = scalar_lea.hbm %s0, %s439
          %s441 = sshll.u32 %s434, 4
          %s442 = int_to_ptr.vmem [resolvable:$true] %s441
          %447 = dma.hbm_to_vmem [thread:$0]  %s440, 256, %s442, %s431, 128, 128, 8
        $region60: #{tpu_custom_call.1} parent=55 // pred_fallthru
          _
      $region56: #{tpu_custom_call.1} parent=5 // pred_fallthru
        _
      %p448 = scmp.le.s32.totalorder 1, %s28
      %p449 = scmp.lt.s32.totalorder %s28, 3
      %p450 = pnand %p448, %p449
      %p451 = pneg %p450
      // Predicated region
      $region61: #{tpu_custom_call.1} parent=5 // pred_check
        _
      $region62: #{tpu_custom_call.1} parent=5 // pred_check_branch
        %453 = sbr.rel (%p450) target = $region64
      $region63: #{tpu_custom_call.1} parent=5 // pred_region
        %s454 = ssub.s32 %s28, 1
        %s455 = sand.u32 %s41, 1
        %s456 = scalar_lea.sflag [#allocation3], %s455
        %s457 = sand.u32 %s41, 1
        %s458 = smul.addr %s457, 16
        %s459 = scalar_lea.vmem [#allocation2], %s458
        // Predicated region
        $region65: #{tpu_custom_call.1} parent=63 // pred_check
          %p460 = pneg %p54
        $region66: #{tpu_custom_call.1} parent=63 // pred_check_branch
          %462 = sbr.rel (%p460) target = $region68
        $region67: #{tpu_custom_call.1} parent=63 // pred_region
          %463 = dma.done %s456, 256
        $region68: #{tpu_custom_call.1} parent=63 // pred_fallthru
          _
        // Predicated region
        $region69: #{tpu_custom_call.1} parent=63 // pred_check
          %p464 = pneg %p75
        $region70: #{tpu_custom_call.1} parent=63 // pred_check_branch
          %466 = sbr.rel (%p464) target = $region72
        $region71: #{tpu_custom_call.1} parent=63 // pred_region
          %467 = dma.done [#allocation6], 256
        $region72: #{tpu_custom_call.1} parent=63 // pred_fallthru
          _
        // Predicated region
        $region73: #{tpu_custom_call.1} parent=63 // pred_check
          %p468 = pneg %p96
        $region74: #{tpu_custom_call.1} parent=63 // pred_check_branch
          %470 = sbr.rel (%p468) target = $region76
        $region75: #{tpu_custom_call.1} parent=63 // pred_region
          %471 = dma.done [#allocation6], 256
        $region76: #{tpu_custom_call.1} parent=63 // pred_fallthru
          _
        // Predicated region
        $region77: #{tpu_custom_call.1} parent=63 // pred_check
          %p472 = pneg %p117
        $region78: #{tpu_custom_call.1} parent=63 // pred_check_branch
          %474 = sbr.rel (%p472) target = $region80
        $region79: #{tpu_custom_call.1} parent=63 // pred_region
          %475 = dma.done [#allocation9], 16
        $region80: #{tpu_custom_call.1} parent=63 // pred_fallthru
          _
        // Predicated region
        $region81: #{tpu_custom_call.1} parent=63 // pred_check
          %p476 = pneg %p138
        $region82: #{tpu_custom_call.1} parent=63 // pred_check_branch
          %478 = sbr.rel (%p476) target = $region84
        $region83: #{tpu_custom_call.1} parent=63 // pred_region
          %479 = dma.done [#allocation9], 16
        $region84: #{tpu_custom_call.1} parent=63 // pred_fallthru
          _
        // Predicated region
        $region85: #{tpu_custom_call.1} parent=63 // pred_check
          %p480 = pneg %p159
        $region86: #{tpu_custom_call.1} parent=63 // pred_check_branch
          %482 = sbr.rel (%p480) target = $region88
        $region87: #{tpu_custom_call.1} parent=63 // pred_region
          %483 = dma.done [#allocation12], 256
        $region88: #{tpu_custom_call.1} parent=63 // pred_fallthru
          _
        // Predicated region
        $region89: #{tpu_custom_call.1} parent=63 // pred_check
          %p484 = pneg %p180
        $region90: #{tpu_custom_call.1} parent=63 // pred_check_branch
          %486 = sbr.rel (%p484) target = $region92
        $region91: #{tpu_custom_call.1} parent=63 // pred_region
          %487 = dma.done [#allocation12], 16
        $region92: #{tpu_custom_call.1} parent=63 // pred_fallthru
          _
        // Predicated region
        $region93: #{tpu_custom_call.1} parent=63 // pred_check
          %p488 = pneg %p201
        $region94: #{tpu_custom_call.1} parent=63 // pred_check_branch
          %490 = sbr.rel (%p488) target = $region96
        $region95: #{tpu_custom_call.1} parent=63 // pred_region
          %491 = dma.done [#allocation15], 512
        $region96: #{tpu_custom_call.1} parent=63 // pred_fallthru
          _
        // Predicated region
        $region97: #{tpu_custom_call.1} parent=63 // pred_check
          %p492 = pneg %p222
        $region98: #{tpu_custom_call.1} parent=63 // pred_check_branch
          %494 = sbr.rel (%p492) target = $region100
        $region99: #{tpu_custom_call.1} parent=63 // pred_region
          %495 = dma.done [#allocation15], 16
        $region100: #{tpu_custom_call.1} parent=63 // pred_fallthru
          _
        // Predicated region
        $region101: #{tpu_custom_call.1} parent=63 // pred_check
          %p496 = pneg %p243
        $region102: #{tpu_custom_call.1} parent=63 // pred_check_branch
          %498 = sbr.rel (%p496) target = $region104
        $region103: #{tpu_custom_call.1} parent=63 // pred_region
          %499 = dma.done [#allocation18], 16
        $region104: #{tpu_custom_call.1} parent=63 // pred_fallthru
          _
        // Predicated region
        $region105: #{tpu_custom_call.1} parent=63 // pred_check
          %p500 = pneg %p264
        $region106: #{tpu_custom_call.1} parent=63 // pred_check_branch
          %502 = sbr.rel (%p500) target = $region108
        $region107: #{tpu_custom_call.1} parent=63 // pred_region
          %503 = dma.done [#allocation18], 16
        $region108: #{tpu_custom_call.1} parent=63 // pred_fallthru
          _
        %s504 = sand.u32 %s41, 1
        %s505 = scalar_lea.sflag [#allocation3], %s504
        %s506 = sand.u32 %s41, 1
        %s507 = smul.addr %s506, 16
        %s508 = scalar_lea.vmem [#allocation2], %s507
        %p509 = pneg %p54
        %p510 = pneg %p51
        %p511 = pneg %p75
        %p512 = pneg %p72
        %p513 = pneg %p96
        %p514 = pneg %p93
        %p515 = pneg %p117
        %p516 = pneg %p114
        %p517 = pneg %p138
        %p518 = pneg %p135
        %p519 = pneg %p159
        %p520 = pneg %p156
        %p521 = pneg %p180
        %p522 = pneg %p177
        %p523 = pneg %p201
        %p524 = pneg %p198
        %p525 = pneg %p222
        %p526 = pneg %p219
        %p527 = pneg %p243
        %p528 = pneg %p240
        %p529 = pneg %p264
        %p530 = pneg %p261
        %p531 = pneg %p290
        %p532 = pneg %p287
        %s533 = sand.u32 %s277, 1
        %s534 = scalar_lea.sflag [#allocation4], %s533
        %s535 = sand.u32 %s277, 1
        %s536 = smul.addr %s535, 16
        %s537 = scalar_lea.vmem [#allocation20], %s536
        %s538 = smul.u32 2, %s33
        %s539 = smul.u32 2, %s33
        %v541 = vld [vmem:[%s459] sm:$0xff]
        %v542 = vld [vmem:[%s459 + $0x8] sm:$0xff]
        %v543 = vpack.c.bf16 %v542, %v541
        %v544 = vld [vmem:[#allocation5] sm:$0xf]
        %v545 = vld [vmem:[#allocation5 + $0x4] sm:$0xf]
        %v546 = vld [vmem:[#allocation5 + $0x8] sm:$0xf]
        %v547 = vld [vmem:[#allocation5 + $0xc] sm:$0xf]
        %v552 = vunpack.c.l.b16 %v544
        %v553 = vunpack.c.l.b16 %v545
        %v554 = vunpack.c.l.b16 %v546
        %v555 = vunpack.c.l.b16 %v547
        %v556 = vpack.c.b16 %v553, %v552
        %v557 = vpack.c.b16 %v555, %v554
        %vm560 = vcmask 261120
        %v562 = vsel %vm560, %v543, 0
        %564 = vmatprep.subr.bf16.mxu0 0
        %565 = vmatpush1.bf16.msra.mxu0 %v556
        %566 = vmatprep.subr.bf16.mxu0 0
        %567 = vmatpush1.bf16.msra.mxu0 %v557
        %568 = vmatprep.subr.bf16.mxu0 0
        %569 = vmatpush1.bf16.msra.mxu0 0
        %570 = vmatprep.subr.bf16.mxu0 0
        %571 = vmatpush1.bf16.msra.mxu0 0
        %572 = vmatprep.subr.bf16.mxu0 0
        %573 = vmatpush1.bf16.msra.mxu0 0
        %574 = vmatprep.subr.bf16.mxu0 0
        %575 = vmatpush1.bf16.msra.mxu0 0
        %576 = vmatprep.subr.bf16.mxu0 0
        %577 = vmatpush1.bf16.msra.mxu0 0
        %578 = vmatprep.subr.bf16.mxu0 0
        %579 = vmatpush1.bf16.msra.mxu0 0
        %580 = vmatprep.subr.bf16.mxu0 0
        %581 = vmatpush1.bf16.msra.mxu0 0
        %582 = vmatprep.subr.bf16.mxu0 0
        %583 = vmatpush1.bf16.msra.mxu0 0
        %584 = vmatprep.subr.bf16.mxu0 0
        %585 = vmatpush1.bf16.msra.mxu0 0
        %586 = vmatprep.subr.bf16.mxu0 0
        %587 = vmatpush1.bf16.msra.mxu0 0
        %588 = vmatprep.subr.bf16.mxu0 0
        %589 = vmatpush1.bf16.msra.mxu0 0
        %590 = vmatprep.subr.bf16.mxu0 0
        %591 = vmatpush1.bf16.msra.mxu0 0
        %592 = vmatprep.subr.bf16.mxu0 0
        %593 = vmatpush1.bf16.msra.mxu0 0
        %594 = vmatprep.subr.bf16.mxu0 0
        %595 = vmatpush1.bf16.msra.mxu0 0
        %596 = vmatprep.mubr.bf16.mxu0 0
        %597 = vmatmul.mubr.bf16.gmra.mrb[0].mxu0 %v562
        %v598 = vpop.f32.mrb[0].mxu0
        %v599 = vadd.f32 0.0, %v598
        %v600 = vpop.f32.mrb[0].mxu0
        %v601 = vpop.f32.mrb[0].mxu0
        %v602 = vadd.f32 0.0, %v601
        %v603 = vpop.f32.mrb[0].mxu0
        %604 = vdwg.mxu0
        %607 = vrot.lane.b32.xlu0 %v599, 120
        %v608 = vpop.permute.xlu0 %607
        %609 = vrot.lane.b32.xlu0 %v602, 120
        %v610 = vpop.permute.xlu0 %609
        %613 = vrot.lane.b32.xlu0 %v599, 112
        %v614 = vpop.permute.xlu0 %613
        %615 = vrot.lane.b32.xlu0 %v602, 112
        %v616 = vpop.permute.xlu0 %615
        %619 = vrot.lane.b32.xlu0 %v599, 104
        %v620 = vpop.permute.xlu0 %619
        %621 = vrot.lane.b32.xlu0 %v602, 104
        %v622 = vpop.permute.xlu0 %621
        %v625 = vpack.c.bf16 %v599, %v599
        %v626 = vpack.c.bf16 %v602, %v602
        %v627 = vpack.c.bf16 %v608, %v608
        %v628 = vpack.c.bf16 %v610, %v610
        %v629 = vpack.c.bf16 %v614, %v614
        %v630 = vpack.c.bf16 %v616, %v616
        %v631 = vpack.c.bf16 %v620, %v620
        %v632 = vpack.c.bf16 %v622, %v622
        %634 = vrot.lane.b32.xlu0 %v625, 96
        %v635 = vpop.permute.xlu0 %634
        %vm636 = vcmask 64512
        %v638 = vsel %vm636, %v625, 0
        %v641 = vsel %vm636, %v635, 0
        %643 = vmatprep.subr.bf16.mxu0 0
        %644 = vmatpush1.bf16.xpose.msra.mxu0 %v641
        %645 = vmatprep.subr.bf16.mxu0 0
        %646 = vmatpush1.bf16.xpose.msra.mxu0 0
        %647 = vmatprep.subr.bf16.mxu0 0
        %648 = vmatpush1.bf16.xpose.msra.mxu0 0
        %649 = vmatprep.subr.bf16.mxu0 0
        %650 = vmatpush1.bf16.xpose.msra.mxu0 0
        %651 = vmatprep.subr.bf16.mxu0 0
        %652 = vmatpush1.bf16.xpose.msra.mxu0 0
        %653 = vmatprep.subr.bf16.mxu0 0
        %654 = vmatpush1.bf16.xpose.msra.mxu0 0
        %655 = vmatprep.subr.bf16.mxu0 0
        %656 = vmatpush1.bf16.xpose.msra.mxu0 0
        %657 = vmatprep.subr.bf16.mxu0 0
        %658 = vmatpush1.bf16.xpose.msra.mxu0 0
        %659 = vmatprep.subr.bf16.mxu0 0
        %660 = vmatpush1.bf16.xpose.msra.mxu0 0
        %661 = vmatprep.subr.bf16.mxu0 0
        %662 = vmatpush1.bf16.xpose.msra.mxu0 0
        %663 = vmatprep.subr.bf16.mxu0 0
        %664 = vmatpush1.bf16.xpose.msra.mxu0 0
        %665 = vmatprep.subr.bf16.mxu0 0
        %666 = vmatpush1.bf16.xpose.msra.mxu0 0
        %667 = vmatprep.subr.bf16.mxu0 0
        %668 = vmatpush1.bf16.xpose.msra.mxu0 0
        %669 = vmatprep.subr.bf16.mxu0 0
        %670 = vmatpush1.bf16.xpose.msra.mxu0 0
        %671 = vmatprep.subr.bf16.mxu0 0
        %672 = vmatpush1.bf16.xpose.msra.mxu0 0
        %673 = vmatprep.subr.bf16.mxu0 0
        %674 = vmatpush1.bf16.xpose.msra.mxu0 0
        %675 = vmatprep.mubr.bf16.mxu0 0
        %676 = vmatmul.mubr.bf16.gmra.mrb[0].mxu0 %v638
        %v677 = vpop.f32.mrb[0].mxu0
        %v678 = vadd.f32 0.0, %v677
        %v679 = vpop.f32.mrb[0].mxu0
        %v680 = vpop.f32.mrb[0].mxu0
        %v681 = vpop.f32.mrb[0].mxu0
        %682 = vdwg.mxu0
        %684 = vrot.lane.b32.xlu0 %v626, 96
        %v685 = vpop.permute.xlu0 %684
        %v687 = vsel %vm636, %v626, 0
        %v690 = vsel %vm636, %v685, 0
        %692 = vmatprep.subr.bf16.mxu0 0
        %693 = vmatpush1.bf16.xpose.msra.mxu0 %v690
        %694 = vmatprep.subr.bf16.mxu0 0
        %695 = vmatpush1.bf16.xpose.msra.mxu0 0
        %696 = vmatprep.subr.bf16.mxu0 0
        %697 = vmatpush1.bf16.xpose.msra.mxu0 0
        %698 = vmatprep.subr.bf16.mxu0 0
        %699 = vmatpush1.bf16.xpose.msra.mxu0 0
        %700 = vmatprep.subr.bf16.mxu0 0
        %701 = vmatpush1.bf16.xpose.msra.mxu0 0
        %702 = vmatprep.subr.bf16.mxu0 0
        %703 = vmatpush1.bf16.xpose.msra.mxu0 0
        %704 = vmatprep.subr.bf16.mxu0 0
        %705 = vmatpush1.bf16.xpose.msra.mxu0 0
        %706 = vmatprep.subr.bf16.mxu0 0
        %707 = vmatpush1.bf16.xpose.msra.mxu0 0
        %708 = vmatprep.subr.bf16.mxu0 0
        %709 = vmatpush1.bf16.xpose.msra.mxu0 0
        %710 = vmatprep.subr.bf16.mxu0 0
        %711 = vmatpush1.bf16.xpose.msra.mxu0 0
        %712 = vmatprep.subr.bf16.mxu0 0
        %713 = vmatpush1.bf16.xpose.msra.mxu0 0
        %714 = vmatprep.subr.bf16.mxu0 0
        %715 = vmatpush1.bf16.xpose.msra.mxu0 0
        %716 = vmatprep.subr.bf16.mxu0 0
        %717 = vmatpush1.bf16.xpose.msra.mxu0 0
        %718 = vmatprep.subr.bf16.mxu0 0
        %719 = vmatpush1.bf16.xpose.msra.mxu0 0
        %720 = vmatprep.subr.bf16.mxu0 0
        %721 = vmatpush1.bf16.xpose.msra.mxu0 0
        %722 = vmatprep.subr.bf16.mxu0 0
        %723 = vmatpush1.bf16.xpose.msra.mxu0 0
        %724 = vmatprep.mubr.bf16.mxu0 0
        %725 = vmatmul.mubr.bf16.gmra.mrb[0].mxu0 %v687
        %v726 = vpop.f32.mrb[0].mxu0
        %v727 = vadd.f32 0.0, %v726
        %v728 = vpop.f32.mrb[0].mxu0
        %v729 = vpop.f32.mrb[0].mxu0
        %v730 = vpop.f32.mrb[0].mxu0
        %731 = vdwg.mxu0
        %733 = vrot.lane.b32.xlu0 %v627, 96
        %v734 = vpop.permute.xlu0 %733
        %v736 = vsel %vm636, %v627, 0
        %v739 = vsel %vm636, %v734, 0
        %741 = vmatprep.subr.bf16.mxu0 0
        %742 = vmatpush1.bf16.xpose.msra.mxu0 %v739
        %743 = vmatprep.subr.bf16.mxu0 0
        %744 = vmatpush1.bf16.xpose.msra.mxu0 0
        %745 = vmatprep.subr.bf16.mxu0 0
        %746 = vmatpush1.bf16.xpose.msra.mxu0 0
        %747 = vmatprep.subr.bf16.mxu0 0
        %748 = vmatpush1.bf16.xpose.msra.mxu0 0
        %749 = vmatprep.subr.bf16.mxu0 0
        %750 = vmatpush1.bf16.xpose.msra.mxu0 0
        %751 = vmatprep.subr.bf16.mxu0 0
        %752 = vmatpush1.bf16.xpose.msra.mxu0 0
        %753 = vmatprep.subr.bf16.mxu0 0
        %754 = vmatpush1.bf16.xpose.msra.mxu0 0
        %755 = vmatprep.subr.bf16.mxu0 0
        %756 = vmatpush1.bf16.xpose.msra.mxu0 0
        %757 = vmatprep.subr.bf16.mxu0 0
        %758 = vmatpush1.bf16.xpose.msra.mxu0 0
        %759 = vmatprep.subr.bf16.mxu0 0
        %760 = vmatpush1.bf16.xpose.msra.mxu0 0
        %761 = vmatprep.subr.bf16.mxu0 0
        %762 = vmatpush1.bf16.xpose.msra.mxu0 0
        %763 = vmatprep.subr.bf16.mxu0 0
        %764 = vmatpush1.bf16.xpose.msra.mxu0 0
        %765 = vmatprep.subr.bf16.mxu0 0
        %766 = vmatpush1.bf16.xpose.msra.mxu0 0
        %767 = vmatprep.subr.bf16.mxu0 0
        %768 = vmatpush1.bf16.xpose.msra.mxu0 0
        %769 = vmatprep.subr.bf16.mxu0 0
        %770 = vmatpush1.bf16.xpose.msra.mxu0 0
        %771 = vmatprep.subr.bf16.mxu0 0
        %772 = vmatpush1.bf16.xpose.msra.mxu0 0
        %773 = vmatprep.mubr.bf16.mxu0 0
        %774 = vmatmul.mubr.bf16.gmra.mrb[0].mxu0 %v736
        %v775 = vpop.f32.mrb[0].mxu0
        %v776 = vadd.f32 0.0, %v775
        %v777 = vpop.f32.mrb[0].mxu0
        %v778 = vpop.f32.mrb[0].mxu0
        %v779 = vpop.f32.mrb[0].mxu0
        %780 = vdwg.mxu0
        %782 = vrot.lane.b32.xlu0 %v628, 96
        %v783 = vpop.permute.xlu0 %782
        %v785 = vsel %vm636, %v628, 0
        %v788 = vsel %vm636, %v783, 0
        %790 = vmatprep.subr.bf16.mxu0 0
        %791 = vmatpush1.bf16.xpose.msra.mxu0 %v788
        %792 = vmatprep.subr.bf16.mxu0 0
        %793 = vmatpush1.bf16.xpose.msra.mxu0 0
        %794 = vmatprep.subr.bf16.mxu0 0
        %795 = vmatpush1.bf16.xpose.msra.mxu0 0
        %796 = vmatprep.subr.bf16.mxu0 0
        %797 = vmatpush1.bf16.xpose.msra.mxu0 0
        %798 = vmatprep.subr.bf16.mxu0 0
        %799 = vmatpush1.bf16.xpose.msra.mxu0 0
        %800 = vmatprep.subr.bf16.mxu0 0
        %801 = vmatpush1.bf16.xpose.msra.mxu0 0
        %802 = vmatprep.subr.bf16.mxu0 0
        %803 = vmatpush1.bf16.xpose.msra.mxu0 0
        %804 = vmatprep.subr.bf16.mxu0 0
        %805 = vmatpush1.bf16.xpose.msra.mxu0 0
        %806 = vmatprep.subr.bf16.mxu0 0
        %807 = vmatpush1.bf16.xpose.msra.mxu0 0
        %808 = vmatprep.subr.bf16.mxu0 0
        %809 = vmatpush1.bf16.xpose.msra.mxu0 0
        %810 = vmatprep.subr.bf16.mxu0 0
        %811 = vmatpush1.bf16.xpose.msra.mxu0 0
        %812 = vmatprep.subr.bf16.mxu0 0
        %813 = vmatpush1.bf16.xpose.msra.mxu0 0
        %814 = vmatprep.subr.bf16.mxu0 0
        %815 = vmatpush1.bf16.xpose.msra.mxu0 0
        %816 = vmatprep.subr.bf16.mxu0 0
        %817 = vmatpush1.bf16.xpose.msra.mxu0 0
        %818 = vmatprep.subr.bf16.mxu0 0
        %819 = vmatpush1.bf16.xpose.msra.mxu0 0
        %820 = vmatprep.subr.bf16.mxu0 0
        %821 = vmatpush1.bf16.xpose.msra.mxu0 0
        %822 = vmatprep.mubr.bf16.mxu0 0
        %823 = vmatmul.mubr.bf16.gmra.mrb[0].mxu0 %v785
        %v824 = vpop.f32.mrb[0].mxu0
        %v825 = vadd.f32 0.0, %v824
        %v826 = vpop.f32.mrb[0].mxu0
        %v827 = vpop.f32.mrb[0].mxu0
        %v828 = vpop.f32.mrb[0].mxu0
        %829 = vdwg.mxu0
        %831 = vrot.lane.b32.xlu0 %v629, 96
        %v832 = vpop.permute.xlu0 %831
        %v834 = vsel %vm636, %v629, 0
        %v837 = vsel %vm636, %v832, 0
        %839 = vmatprep.subr.bf16.mxu0 0
        %840 = vmatpush1.bf16.xpose.msra.mxu0 %v837
        %841 = vmatprep.subr.bf16.mxu0 0
        %842 = vmatpush1.bf16.xpose.msra.mxu0 0
        %843 = vmatprep.subr.bf16.mxu0 0
        %844 = vmatpush1.bf16.xpose.msra.mxu0 0
        %845 = vmatprep.subr.bf16.mxu0 0
        %846 = vmatpush1.bf16.xpose.msra.mxu0 0
        %847 = vmatprep.subr.bf16.mxu0 0
        %848 = vmatpush1.bf16.xpose.msra.mxu0 0
        %849 = vmatprep.subr.bf16.mxu0 0
        %850 = vmatpush1.bf16.xpose.msra.mxu0 0
        %851 = vmatprep.subr.bf16.mxu0 0
        %852 = vmatpush1.bf16.xpose.msra.mxu0 0
        %853 = vmatprep.subr.bf16.mxu0 0
        %854 = vmatpush1.bf16.xpose.msra.mxu0 0
        %855 = vmatprep.subr.bf16.mxu0 0
        %856 = vmatpush1.bf16.xpose.msra.mxu0 0
        %857 = vmatprep.subr.bf16.mxu0 0
        %858 = vmatpush1.bf16.xpose.msra.mxu0 0
        %859 = vmatprep.subr.bf16.mxu0 0
        %860 = vmatpush1.bf16.xpose.msra.mxu0 0
        %861 = vmatprep.subr.bf16.mxu0 0
        %862 = vmatpush1.bf16.xpose.msra.mxu0 0
        %863 = vmatprep.subr.bf16.mxu0 0
        %864 = vmatpush1.bf16.xpose.msra.mxu0 0
        %865 = vmatprep.subr.bf16.mxu0 0
        %866 = vmatpush1.bf16.xpose.msra.mxu0 0
        %867 = vmatprep.subr.bf16.mxu0 0
        %868 = vmatpush1.bf16.xpose.msra.mxu0 0
        %869 = vmatprep.subr.bf16.mxu0 0
        %870 = vmatpush1.bf16.xpose.msra.mxu0 0
        %871 = vmatprep.mubr.bf16.mxu0 0
        %872 = vmatmul.mubr.bf16.gmra.mrb[0].mxu0 %v834
        %v873 = vpop.f32.mrb[0].mxu0
        %v874 = vadd.f32 0.0, %v873
        %v875 = vpop.f32.mrb[0].mxu0
        %v876 = vpop.f32.mrb[0].mxu0
        %v877 = vpop.f32.mrb[0].mxu0
        %878 = vdwg.mxu0
        %880 = vrot.lane.b32.xlu0 %v630, 96
        %v881 = vpop.permute.xlu0 %880
        %v883 = vsel %vm636, %v630, 0
        %v886 = vsel %vm636, %v881, 0
        %888 = vmatprep.subr.bf16.mxu0 0
        %889 = vmatpush1.bf16.xpose.msra.mxu0 %v886
        %890 = vmatprep.subr.bf16.mxu0 0
        %891 = vmatpush1.bf16.xpose.msra.mxu0 0
        %892 = vmatprep.subr.bf16.mxu0 0
        %893 = vmatpush1.bf16.xpose.msra.mxu0 0
        %894 = vmatprep.subr.bf16.mxu0 0
        %895 = vmatpush1.bf16.xpose.msra.mxu0 0
        %896 = vmatprep.subr.bf16.mxu0 0
        %897 = vmatpush1.bf16.xpose.msra.mxu0 0
        %898 = vmatprep.subr.bf16.mxu0 0
        %899 = vmatpush1.bf16.xpose.msra.mxu0 0
        %900 = vmatprep.subr.bf16.mxu0 0
        %901 = vmatpush1.bf16.xpose.msra.mxu0 0
        %902 = vmatprep.subr.bf16.mxu0 0
        %903 = vmatpush1.bf16.xpose.msra.mxu0 0
        %904 = vmatprep.subr.bf16.mxu0 0
        %905 = vmatpush1.bf16.xpose.msra.mxu0 0
        %906 = vmatprep.subr.bf16.mxu0 0
        %907 = vmatpush1.bf16.xpose.msra.mxu0 0
        %908 = vmatprep.subr.bf16.mxu0 0
        %909 = vmatpush1.bf16.xpose.msra.mxu0 0
        %910 = vmatprep.subr.bf16.mxu0 0
        %911 = vmatpush1.bf16.xpose.msra.mxu0 0
        %912 = vmatprep.subr.bf16.mxu0 0
        %913 = vmatpush1.bf16.xpose.msra.mxu0 0
        %914 = vmatprep.subr.bf16.mxu0 0
        %915 = vmatpush1.bf16.xpose.msra.mxu0 0
        %916 = vmatprep.subr.bf16.mxu0 0
        %917 = vmatpush1.bf16.xpose.msra.mxu0 0
        %918 = vmatprep.subr.bf16.mxu0 0
        %919 = vmatpush1.bf16.xpose.msra.mxu0 0
        %920 = vmatprep.mubr.bf16.mxu0 0
        %921 = vmatmul.mubr.bf16.gmra.mrb[0].mxu0 %v883
        %v922 = vpop.f32.mrb[0].mxu0
        %v923 = vadd.f32 0.0, %v922
        %v924 = vpop.f32.mrb[0].mxu0
        %v925 = vpop.f32.mrb[0].mxu0
        %v926 = vpop.f32.mrb[0].mxu0
        %927 = vdwg.mxu0
        %929 = vrot.lane.b32.xlu0 %v631, 96
        %v930 = vpop.permute.xlu0 %929
        %v932 = vsel %vm636, %v631, 0
        %v935 = vsel %vm636, %v930, 0
        %937 = vmatprep.subr.bf16.mxu0 0
        %938 = vmatpush1.bf16.xpose.msra.mxu0 %v935
        %939 = vmatprep.subr.bf16.mxu0 0
        %940 = vmatpush1.bf16.xpose.msra.mxu0 0
        %941 = vmatprep.subr.bf16.mxu0 0
        %942 = vmatpush1.bf16.xpose.msra.mxu0 0
        %943 = vmatprep.subr.bf16.mxu0 0
        %944 = vmatpush1.bf16.xpose.msra.mxu0 0
        %945 = vmatprep.subr.bf16.mxu0 0
        %946 = vmatpush1.bf16.xpose.msra.mxu0 0
        %947 = vmatprep.subr.bf16.mxu0 0
        %948 = vmatpush1.bf16.xpose.msra.mxu0 0
        %949 = vmatprep.subr.bf16.mxu0 0
        %950 = vmatpush1.bf16.xpose.msra.mxu0 0
        %951 = vmatprep.subr.bf16.mxu0 0
        %952 = vmatpush1.bf16.xpose.msra.mxu0 0
        %953 = vmatprep.subr.bf16.mxu0 0
        %954 = vmatpush1.bf16.xpose.msra.mxu0 0
        %955 = vmatprep.subr.bf16.mxu0 0
        %956 = vmatpush1.bf16.xpose.msra.mxu0 0
        %957 = vmatprep.subr.bf16.mxu0 0
        %958 = vmatpush1.bf16.xpose.msra.mxu0 0
        %959 = vmatprep.subr.bf16.mxu0 0
        %960 = vmatpush1.bf16.xpose.msra.mxu0 0
        %961 = vmatprep.subr.bf16.mxu0 0
        %962 = vmatpush1.bf16.xpose.msra.mxu0 0
        %963 = vmatprep.subr.bf16.mxu0 0
        %964 = vmatpush1.bf16.xpose.msra.mxu0 0
        %965 = vmatprep.subr.bf16.mxu0 0
        %966 = vmatpush1.bf16.xpose.msra.mxu0 0
        %967 = vmatprep.subr.bf16.mxu0 0
        %968 = vmatpush1.bf16.xpose.msra.mxu0 0
        %969 = vmatprep.mubr.bf16.mxu0 0
        %970 = vmatmul.mubr.bf16.gmra.mrb[0].mxu0 %v932
        %v971 = vpop.f32.mrb[0].mxu0
        %v972 = vadd.f32 0.0, %v971
        %v973 = vpop.f32.mrb[0].mxu0
        %v974 = vpop.f32.mrb[0].mxu0
        %v975 = vpop.f32.mrb[0].mxu0
        %976 = vdwg.mxu0
        %978 = vrot.lane.b32.xlu0 %v632, 96
        %v979 = vpop.permute.xlu0 %978
        %v981 = vsel %vm636, %v632, 0
        %v984 = vsel %vm636, %v979, 0
        %986 = vmatprep.subr.bf16.mxu0 0
        %987 = vmatpush1.bf16.xpose.msra.mxu0 %v984
        %988 = vmatprep.subr.bf16.mxu0 0
        %989 = vmatpush1.bf16.xpose.msra.mxu0 0
        %990 = vmatprep.subr.bf16.mxu0 0
        %991 = vmatpush1.bf16.xpose.msra.mxu0 0
        %992 = vmatprep.subr.bf16.mxu0 0
        %993 = vmatpush1.bf16.xpose.msra.mxu0 0
        %994 = vmatprep.subr.bf16.mxu0 0
        %995 = vmatpush1.bf16.xpose.msra.mxu0 0
        %996 = vmatprep.subr.bf16.mxu0 0
        %997 = vmatpush1.bf16.xpose.msra.mxu0 0
        %998 = vmatprep.subr.bf16.mxu0 0
        %999 = vmatpush1.bf16.xpose.msra.mxu0 0
        %1000 = vmatprep.subr.bf16.mxu0 0
        %1001 = vmatpush1.bf16.xpose.msra.mxu0 0
        %1002 = vmatprep.subr.bf16.mxu0 0
        %1003 = vmatpush1.bf16.xpose.msra.mxu0 0
        %1004 = vmatprep.subr.bf16.mxu0 0
        %1005 = vmatpush1.bf16.xpose.msra.mxu0 0
        %1006 = vmatprep.subr.bf16.mxu0 0
        %1007 = vmatpush1.bf16.xpose.msra.mxu0 0
        %1008 = vmatprep.subr.bf16.mxu0 0
        %1009 = vmatpush1.bf16.xpose.msra.mxu0 0
        %1010 = vmatprep.subr.bf16.mxu0 0
        %1011 = vmatpush1.bf16.xpose.msra.mxu0 0
        %1012 = vmatprep.subr.bf16.mxu0 0
        %1013 = vmatpush1.bf16.xpose.msra.mxu0 0
        %1014 = vmatprep.subr.bf16.mxu0 0
        %1015 = vmatpush1.bf16.xpose.msra.mxu0 0
        %1016 = vmatprep.subr.bf16.mxu0 0
        %1017 = vmatpush1.bf16.xpose.msra.mxu0 0
        %1018 = vmatprep.mubr.bf16.mxu0 0
        %1019 = vmatmul.mubr.bf16.gmra.mrb[0].mxu0 %v981
        %v1020 = vpop.f32.mrb[0].mxu0
        %v1021 = vadd.f32 0.0, %v1020
        %v1022 = vpop.f32.mrb[0].mxu0
        %v1023 = vpop.f32.mrb[0].mxu0
        %v1024 = vpop.f32.mrb[0].mxu0
        %1025 = vdwg.mxu0
        %v1026 = vsel %vm636, %v678, -inf
        %1027 = vmax.xlane.f32.xlu0 %v1026
        %v1028 = vpop.xlane.xlu0 %1027
        %v1029 = vsel %vm636, %v727, -inf
        %1030 = vmax.xlane.f32.xlu0 %v1029
        %v1031 = vpop.xlane.xlu0 %1030
        %v1032 = vsel %vm636, %v776, -inf
        %1033 = vmax.xlane.f32.xlu0 %v1032
        %v1034 = vpop.xlane.xlu0 %1033
        %v1035 = vsel %vm636, %v825, -inf
        %1036 = vmax.xlane.f32.xlu0 %v1035
        %v1037 = vpop.xlane.xlu0 %1036
        %v1038 = vsel %vm636, %v874, -inf
        %1039 = vmax.xlane.f32.xlu0 %v1038
        %v1040 = vpop.xlane.xlu0 %1039
        %v1041 = vsel %vm636, %v923, -inf
        %1042 = vmax.xlane.f32.xlu0 %v1041
        %v1043 = vpop.xlane.xlu0 %1042
        %v1044 = vsel %vm636, %v972, -inf
        %1045 = vmax.xlane.f32.xlu0 %v1044
        %v1046 = vpop.xlane.xlu0 %1045
        %v1047 = vsel %vm636, %v1021, -inf
        %1048 = vmax.xlane.f32.xlu0 %v1047
        %v1049 = vpop.xlane.xlu0 %1048
        %v1050 = vsub.f32 %v678, %v1028
        %v1051 = vsub.f32 %v727, %v1031
        %v1052 = vsub.f32 %v776, %v1034
        %v1053 = vsub.f32 %v825, %v1037
        %v1054 = vsub.f32 %v874, %v1040
        %v1055 = vsub.f32 %v923, %v1043
        %v1056 = vsub.f32 %v972, %v1046
        %v1057 = vsub.f32 %v1021, %v1049
        %v1058 = vmul.f32 %v1050, 1.442695
        %v1059 = vpow.pop %v1058
        %v1060 = vmul.f32 %v1051, 1.442695
        %v1061 = vpow.pop %v1060
        %v1062 = vmul.f32 %v1052, 1.442695
        %v1063 = vpow.pop %v1062
        %v1064 = vmul.f32 %v1053, 1.442695
        %v1065 = vpow.pop %v1064
        %v1066 = vmul.f32 %v1054, 1.442695
        %v1067 = vpow.pop %v1066
        %v1068 = vmul.f32 %v1055, 1.442695
        %v1069 = vpow.pop %v1068
        %v1070 = vmul.f32 %v1056, 1.442695
        %v1071 = vpow.pop %v1070
        %v1072 = vmul.f32 %v1057, 1.442695
        %v1073 = vpow.pop %v1072
        %v1074 = vsel %vm636, %v1059, 0.0
        %1075 = vadd.xlane.f32.xlu0 %v1074
        %v1076 = vpop.xlane.xlu0 %1075
        %v1077 = vsel %vm636, %v1061, 0.0
        %1078 = vadd.xlane.f32.xlu0 %v1077
        %v1079 = vpop.xlane.xlu0 %1078
        %v1080 = vsel %vm636, %v1063, 0.0
        %1081 = vadd.xlane.f32.xlu0 %v1080
        %v1082 = vpop.xlane.xlu0 %1081
        %v1083 = vsel %vm636, %v1065, 0.0
        %1084 = vadd.xlane.f32.xlu0 %v1083
        %v1085 = vpop.xlane.xlu0 %1084
        %v1086 = vsel %vm636, %v1067, 0.0
        %1087 = vadd.xlane.f32.xlu0 %v1086
        %v1088 = vpop.xlane.xlu0 %1087
        %v1089 = vsel %vm636, %v1069, 0.0
        %1090 = vadd.xlane.f32.xlu0 %v1089
        %v1091 = vpop.xlane.xlu0 %1090
        %v1092 = vsel %vm636, %v1071, 0.0
        %1093 = vadd.xlane.f32.xlu0 %v1092
        %v1094 = vpop.xlane.xlu0 %1093
        %v1095 = vsel %vm636, %v1073, 0.0
        %1096 = vadd.xlane.f32.xlu0 %v1095
        %v1097 = vpop.xlane.xlu0 %1096
        %v1098 = vrcp.pop %v1076
        %v1099 = vrcp.pop %v1079
        %v1100 = vrcp.pop %v1082
        %v1101 = vrcp.pop %v1085
        %v1102 = vrcp.pop %v1088
        %v1103 = vrcp.pop %v1091
        %v1104 = vrcp.pop %v1094
        %v1105 = vrcp.pop %v1097
        %v1106 = vmul.f32 %v1059, %v1098
        %v1107 = vmul.f32 %v1061, %v1099
        %v1108 = vmul.f32 %v1063, %v1100
        %v1109 = vmul.f32 %v1065, %v1101
        %v1110 = vmul.f32 %v1067, %v1102
        %v1111 = vmul.f32 %v1069, %v1103
        %v1112 = vmul.f32 %v1071, %v1104
        %v1113 = vmul.f32 %v1073, %v1105
        %v1114 = vpack.c.bf16 %v1106, %v1106
        %v1115 = vpack.c.bf16 %v1107, %v1107
        %v1116 = vpack.c.bf16 %v1108, %v1108
        %v1117 = vpack.c.bf16 %v1109, %v1109
        %v1118 = vpack.c.bf16 %v1110, %v1110
        %v1119 = vpack.c.bf16 %v1111, %v1111
        %v1120 = vpack.c.bf16 %v1112, %v1112
        %v1121 = vpack.c.bf16 %v1113, %v1113
        %1122 = vrot.lane.b32.xlu0 %v625, 64
        %v1123 = vpop.permute.xlu0 %1122
        %v1125 = vsel %vm636, %v1114, 0
        %vm1127 = vcmask 1043456
        %v1129 = vsel %vm1127, %v1123, 0
        %1131 = vmatprep.subr.bf16.mxu0 0
        %1132 = vmatpush1.bf16.msra.mxu0 %v1129
        %1133 = vmatprep.subr.bf16.mxu0 0
        %1134 = vmatpush1.bf16.msra.mxu0 0
        %1135 = vmatprep.subr.bf16.mxu0 0
        %1136 = vmatpush1.bf16.msra.mxu0 0
        %1137 = vmatprep.subr.bf16.mxu0 0
        %1138 = vmatpush1.bf16.msra.mxu0 0
        %1139 = vmatprep.subr.bf16.mxu0 0
        %1140 = vmatpush1.bf16.msra.mxu0 0
        %1141 = vmatprep.subr.bf16.mxu0 0
        %1142 = vmatpush1.bf16.msra.mxu0 0
        %1143 = vmatprep.subr.bf16.mxu0 0
        %1144 = vmatpush1.bf16.msra.mxu0 0
        %1145 = vmatprep.subr.bf16.mxu0 0
        %1146 = vmatpush1.bf16.msra.mxu0 0
        %1147 = vmatprep.subr.bf16.mxu0 0
        %1148 = vmatpush1.bf16.msra.mxu0 0
        %1149 = vmatprep.subr.bf16.mxu0 0
        %1150 = vmatpush1.bf16.msra.mxu0 0
        %1151 = vmatprep.subr.bf16.mxu0 0
        %1152 = vmatpush1.bf16.msra.mxu0 0
        %1153 = vmatprep.subr.bf16.mxu0 0
        %1154 = vmatpush1.bf16.msra.mxu0 0
        %1155 = vmatprep.subr.bf16.mxu0 0
        %1156 = vmatpush1.bf16.msra.mxu0 0
        %1157 = vmatprep.subr.bf16.mxu0 0
        %1158 = vmatpush1.bf16.msra.mxu0 0
        %1159 = vmatprep.subr.bf16.mxu0 0
        %1160 = vmatpush1.bf16.msra.mxu0 0
        %1161 = vmatprep.subr.bf16.mxu0 0
        %1162 = vmatpush1.bf16.msra.mxu0 0
        %1163 = vmatprep.mubr.bf16.mxu0 0
        %1164 = vmatmul.mubr.bf16.gmra.mrb[0].mxu0 %v1125
        %v1165 = vpop.f32.mrb[0].mxu0
        %v1166 = vadd.f32 0.0, %v1165
        %v1167 = vpop.f32.mrb[0].mxu0
        %v1168 = vpop.f32.mrb[0].mxu0
        %v1169 = vpop.f32.mrb[0].mxu0
        %1170 = vdwg.mxu0
        %1171 = vrot.lane.b32.xlu0 %v626, 64
        %v1172 = vpop.permute.xlu0 %1171
        %v1174 = vsel %vm636, %v1115, 0
        %v1177 = vsel %vm1127, %v1172, 0
        %1179 = vmatprep.subr.bf16.mxu0 0
        %1180 = vmatpush1.bf16.msra.mxu0 %v1177
        %1181 = vmatprep.subr.bf16.mxu0 0
        %1182 = vmatpush1.bf16.msra.mxu0 0
        %1183 = vmatprep.subr.bf16.mxu0 0
        %1184 = vmatpush1.bf16.msra.mxu0 0
        %1185 = vmatprep.subr.bf16.mxu0 0
        %1186 = vmatpush1.bf16.msra.mxu0 0
        %1187 = vmatprep.subr.bf16.mxu0 0
        %1188 = vmatpush1.bf16.msra.mxu0 0
        %1189 = vmatprep.subr.bf16.mxu0 0
        %1190 = vmatpush1.bf16.msra.mxu0 0
        %1191 = vmatprep.subr.bf16.mxu0 0
        %1192 = vmatpush1.bf16.msra.mxu0 0
        %1193 = vmatprep.subr.bf16.mxu0 0
        %1194 = vmatpush1.bf16.msra.mxu0 0
        %1195 = vmatprep.subr.bf16.mxu0 0
        %1196 = vmatpush1.bf16.msra.mxu0 0
        %1197 = vmatprep.subr.bf16.mxu0 0
        %1198 = vmatpush1.bf16.msra.mxu0 0
        %1199 = vmatprep.subr.bf16.mxu0 0
        %1200 = vmatpush1.bf16.msra.mxu0 0
        %1201 = vmatprep.subr.bf16.mxu0 0
        %1202 = vmatpush1.bf16.msra.mxu0 0
        %1203 = vmatprep.subr.bf16.mxu0 0
        %1204 = vmatpush1.bf16.msra.mxu0 0
        %1205 = vmatprep.subr.bf16.mxu0 0
        %1206 = vmatpush1.bf16.msra.mxu0 0
        %1207 = vmatprep.subr.bf16.mxu0 0
        %1208 = vmatpush1.bf16.msra.mxu0 0
        %1209 = vmatprep.subr.bf16.mxu0 0
        %1210 = vmatpush1.bf16.msra.mxu0 0
        %1211 = vmatprep.mubr.bf16.mxu0 0
        %1212 = vmatmul.mubr.bf16.gmra.mrb[0].mxu0 %v1174
        %v1213 = vpop.f32.mrb[0].mxu0
        %v1214 = vadd.f32 0.0, %v1213
        %v1215 = vpop.f32.mrb[0].mxu0
        %v1216 = vpop.f32.mrb[0].mxu0
        %v1217 = vpop.f32.mrb[0].mxu0
        %1218 = vdwg.mxu0
        %1219 = vrot.lane.b32.xlu0 %v627, 64
        %v1220 = vpop.permute.xlu0 %1219
        %v1222 = vsel %vm636, %v1116, 0
        %v1225 = vsel %vm1127, %v1220, 0
        %1227 = vmatprep.subr.bf16.mxu0 0
        %1228 = vmatpush1.bf16.msra.mxu0 %v1225
        %1229 = vmatprep.subr.bf16.mxu0 0
        %1230 = vmatpush1.bf16.msra.mxu0 0
        %1231 = vmatprep.subr.bf16.mxu0 0
        %1232 = vmatpush1.bf16.msra.mxu0 0
        %1233 = vmatprep.subr.bf16.mxu0 0
        %1234 = vmatpush1.bf16.msra.mxu0 0
        %1235 = vmatprep.subr.bf16.mxu0 0
        %1236 = vmatpush1.bf16.msra.mxu0 0
        %1237 = vmatprep.subr.bf16.mxu0 0
        %1238 = vmatpush1.bf16.msra.mxu0 0
        %1239 = vmatprep.subr.bf16.mxu0 0
        %1240 = vmatpush1.bf16.msra.mxu0 0
        %1241 = vmatprep.subr.bf16.mxu0 0
        %1242 = vmatpush1.bf16.msra.mxu0 0
        %1243 = vmatprep.subr.bf16.mxu0 0
        %1244 = vmatpush1.bf16.msra.mxu0 0
        %1245 = vmatprep.subr.bf16.mxu0 0
        %1246 = vmatpush1.bf16.msra.mxu0 0
        %1247 = vmatprep.subr.bf16.mxu0 0
        %1248 = vmatpush1.bf16.msra.mxu0 0
        %1249 = vmatprep.subr.bf16.mxu0 0
        %1250 = vmatpush1.bf16.msra.mxu0 0
        %1251 = vmatprep.subr.bf16.mxu0 0
        %1252 = vmatpush1.bf16.msra.mxu0 0
        %1253 = vmatprep.subr.bf16.mxu0 0
        %1254 = vmatpush1.bf16.msra.mxu0 0
        %1255 = vmatprep.subr.bf16.mxu0 0
        %1256 = vmatpush1.bf16.msra.mxu0 0
        %1257 = vmatprep.subr.bf16.mxu0 0
        %1258 = vmatpush1.bf16.msra.mxu0 0
        %1259 = vmatprep.mubr.bf16.mxu0 0
        %1260 = vmatmul.mubr.bf16.gmra.mrb[0].mxu0 %v1222
        %v1261 = vpop.f32.mrb[0].mxu0
        %v1262 = vadd.f32 0.0, %v1261
        %v1263 = vpop.f32.mrb[0].mxu0
        %v1264 = vpop.f32.mrb[0].mxu0
        %v1265 = vpop.f32.mrb[0].mxu0
        %1266 = vdwg.mxu0
        %1267 = vrot.lane.b32.xlu0 %v628, 64
        %v1268 = vpop.permute.xlu0 %1267
        %v1270 = vsel %vm636, %v1117, 0
        %v1273 = vsel %vm1127, %v1268, 0
        %1275 = vmatprep.subr.bf16.mxu0 0
        %1276 = vmatpush1.bf16.msra.mxu0 %v1273
        %1277 = vmatprep.subr.bf16.mxu0 0
        %1278 = vmatpush1.bf16.msra.mxu0 0
        %1279 = vmatprep.subr.bf16.mxu0 0
        %1280 = vmatpush1.bf16.msra.mxu0 0
        %1281 = vmatprep.subr.bf16.mxu0 0
        %1282 = vmatpush1.bf16.msra.mxu0 0
        %1283 = vmatprep.subr.bf16.mxu0 0
        %1284 = vmatpush1.bf16.msra.mxu0 0
        %1285 = vmatprep.subr.bf16.mxu0 0
        %1286 = vmatpush1.bf16.msra.mxu0 0
        %1287 = vmatprep.subr.bf16.mxu0 0
        %1288 = vmatpush1.bf16.msra.mxu0 0
        %1289 = vmatprep.subr.bf16.mxu0 0
        %1290 = vmatpush1.bf16.msra.mxu0 0
        %1291 = vmatprep.subr.bf16.mxu0 0
        %1292 = vmatpush1.bf16.msra.mxu0 0
        %1293 = vmatprep.subr.bf16.mxu0 0
        %1294 = vmatpush1.bf16.msra.mxu0 0
        %1295 = vmatprep.subr.bf16.mxu0 0
        %1296 = vmatpush1.bf16.msra.mxu0 0
        %1297 = vmatprep.subr.bf16.mxu0 0
        %1298 = vmatpush1.bf16.msra.mxu0 0
        %1299 = vmatprep.subr.bf16.mxu0 0
        %1300 = vmatpush1.bf16.msra.mxu0 0
        %1301 = vmatprep.subr.bf16.mxu0 0
        %1302 = vmatpush1.bf16.msra.mxu0 0
        %1303 = vmatprep.subr.bf16.mxu0 0
        %1304 = vmatpush1.bf16.msra.mxu0 0
        %1305 = vmatprep.subr.bf16.mxu0 0
        %1306 = vmatpush1.bf16.msra.mxu0 0
        %1307 = vmatprep.mubr.bf16.mxu0 0
        %1308 = vmatmul.mubr.bf16.gmra.mrb[0].mxu0 %v1270
        %v1309 = vpop.f32.mrb[0].mxu0
        %v1310 = vadd.f32 0.0, %v1309
        %v1311 = vpop.f32.mrb[0].mxu0
        %v1312 = vpop.f32.mrb[0].mxu0
        %v1313 = vpop.f32.mrb[0].mxu0
        %1314 = vdwg.mxu0
        %1315 = vrot.lane.b32.xlu0 %v629, 64
        %v1316 = vpop.permute.xlu0 %1315
        %v1318 = vsel %vm636, %v1118, 0
        %v1321 = vsel %vm1127, %v1316, 0
        %1323 = vmatprep.subr.bf16.mxu0 0
        %1324 = vmatpush1.bf16.msra.mxu0 %v1321
        %1325 = vmatprep.subr.bf16.mxu0 0
        %1326 = vmatpush1.bf16.msra.mxu0 0
        %1327 = vmatprep.subr.bf16.mxu0 0
        %1328 = vmatpush1.bf16.msra.mxu0 0
        %1329 = vmatprep.subr.bf16.mxu0 0
        %1330 = vmatpush1.bf16.msra.mxu0 0
        %1331 = vmatprep.subr.bf16.mxu0 0
        %1332 = vmatpush1.bf16.msra.mxu0 0
        %1333 = vmatprep.subr.bf16.mxu0 0
        %1334 = vmatpush1.bf16.msra.mxu0 0
        %1335 = vmatprep.subr.bf16.mxu0 0
        %1336 = vmatpush1.bf16.msra.mxu0 0
        %1337 = vmatprep.subr.bf16.mxu0 0
        %1338 = vmatpush1.bf16.msra.mxu0 0
        %1339 = vmatprep.subr.bf16.mxu0 0
        %1340 = vmatpush1.bf16.msra.mxu0 0
        %1341 = vmatprep.subr.bf16.mxu0 0
        %1342 = vmatpush1.bf16.msra.mxu0 0
        %1343 = vmatprep.subr.bf16.mxu0 0
        %1344 = vmatpush1.bf16.msra.mxu0 0
        %1345 = vmatprep.subr.bf16.mxu0 0
        %1346 = vmatpush1.bf16.msra.mxu0 0
        %1347 = vmatprep.subr.bf16.mxu0 0
        %1348 = vmatpush1.bf16.msra.mxu0 0
        %1349 = vmatprep.subr.bf16.mxu0 0
        %1350 = vmatpush1.bf16.msra.mxu0 0
        %1351 = vmatprep.subr.bf16.mxu0 0
        %1352 = vmatpush1.bf16.msra.mxu0 0
        %1353 = vmatprep.subr.bf16.mxu0 0
        %1354 = vmatpush1.bf16.msra.mxu0 0
        %1355 = vmatprep.mubr.bf16.mxu0 0
        %1356 = vmatmul.mubr.bf16.gmra.mrb[0].mxu0 %v1318
        %v1357 = vpop.f32.mrb[0].mxu0
        %v1358 = vadd.f32 0.0, %v1357
        %v1359 = vpop.f32.mrb[0].mxu0
        %v1360 = vpop.f32.mrb[0].mxu0
        %v1361 = vpop.f32.mrb[0].mxu0
        %1362 = vdwg.mxu0
        %1363 = vrot.lane.b32.xlu0 %v630, 64
        %v1364 = vpop.permute.xlu0 %1363
        %v1366 = vsel %vm636, %v1119, 0
        %v1369 = vsel %vm1127, %v1364, 0
        %1371 = vmatprep.subr.bf16.mxu0 0
        %1372 = vmatpush1.bf16.msra.mxu0 %v1369
        %1373 = vmatprep.subr.bf16.mxu0 0
        %1374 = vmatpush1.bf16.msra.mxu0 0
        %1375 = vmatprep.subr.bf16.mxu0 0
        %1376 = vmatpush1.bf16.msra.mxu0 0
        %1377 = vmatprep.subr.bf16.mxu0 0
        %1378 = vmatpush1.bf16.msra.mxu0 0
        %1379 = vmatprep.subr.bf16.mxu0 0
        %1380 = vmatpush1.bf16.msra.mxu0 0
        %1381 = vmatprep.subr.bf16.mxu0 0
        %1382 = vmatpush1.bf16.msra.mxu0 0
        %1383 = vmatprep.subr.bf16.mxu0 0
        %1384 = vmatpush1.bf16.msra.mxu0 0
        %1385 = vmatprep.subr.bf16.mxu0 0
        %1386 = vmatpush1.bf16.msra.mxu0 0
        %1387 = vmatprep.subr.bf16.mxu0 0
        %1388 = vmatpush1.bf16.msra.mxu0 0
        %1389 = vmatprep.subr.bf16.mxu0 0
        %1390 = vmatpush1.bf16.msra.mxu0 0
        %1391 = vmatprep.subr.bf16.mxu0 0
        %1392 = vmatpush1.bf16.msra.mxu0 0
        %1393 = vmatprep.subr.bf16.mxu0 0
        %1394 = vmatpush1.bf16.msra.mxu0 0
        %1395 = vmatprep.subr.bf16.mxu0 0
        %1396 = vmatpush1.bf16.msra.mxu0 0
        %1397 = vmatprep.subr.bf16.mxu0 0
        %1398 = vmatpush1.bf16.msra.mxu0 0
        %1399 = vmatprep.subr.bf16.mxu0 0
        %1400 = vmatpush1.bf16.msra.mxu0 0
        %1401 = vmatprep.subr.bf16.mxu0 0
        %1402 = vmatpush1.bf16.msra.mxu0 0
        %1403 = vmatprep.mubr.bf16.mxu0 0
        %1404 = vmatmul.mubr.bf16.gmra.mrb[0].mxu0 %v1366
        %v1405 = vpop.f32.mrb[0].mxu0
        %v1406 = vadd.f32 0.0, %v1405
        %v1407 = vpop.f32.mrb[0].mxu0
        %v1408 = vpop.f32.mrb[0].mxu0
        %v1409 = vpop.f32.mrb[0].mxu0
        %1410 = vdwg.mxu0
        %1411 = vrot.lane.b32.xlu0 %v631, 64
        %v1412 = vpop.permute.xlu0 %1411
        %v1414 = vsel %vm636, %v1120, 0
        %v1417 = vsel %vm1127, %v1412, 0
        %1419 = vmatprep.subr.bf16.mxu0 0
        %1420 = vmatpush1.bf16.msra.mxu0 %v1417
        %1421 = vmatprep.subr.bf16.mxu0 0
        %1422 = vmatpush1.bf16.msra.mxu0 0
        %1423 = vmatprep.subr.bf16.mxu0 0
        %1424 = vmatpush1.bf16.msra.mxu0 0
        %1425 = vmatprep.subr.bf16.mxu0 0
        %1426 = vmatpush1.bf16.msra.mxu0 0
        %1427 = vmatprep.subr.bf16.mxu0 0
        %1428 = vmatpush1.bf16.msra.mxu0 0
        %1429 = vmatprep.subr.bf16.mxu0 0
        %1430 = vmatpush1.bf16.msra.mxu0 0
        %1431 = vmatprep.subr.bf16.mxu0 0
        %1432 = vmatpush1.bf16.msra.mxu0 0
        %1433 = vmatprep.subr.bf16.mxu0 0
        %1434 = vmatpush1.bf16.msra.mxu0 0
        %1435 = vmatprep.subr.bf16.mxu0 0
        %1436 = vmatpush1.bf16.msra.mxu0 0
        %1437 = vmatprep.subr.bf16.mxu0 0
        %1438 = vmatpush1.bf16.msra.mxu0 0
        %1439 = vmatprep.subr.bf16.mxu0 0
        %1440 = vmatpush1.bf16.msra.mxu0 0
        %1441 = vmatprep.subr.bf16.mxu0 0
        %1442 = vmatpush1.bf16.msra.mxu0 0
        %1443 = vmatprep.subr.bf16.mxu0 0
        %1444 = vmatpush1.bf16.msra.mxu0 0
        %1445 = vmatprep.subr.bf16.mxu0 0
        %1446 = vmatpush1.bf16.msra.mxu0 0
        %1447 = vmatprep.subr.bf16.mxu0 0
        %1448 = vmatpush1.bf16.msra.mxu0 0
        %1449 = vmatprep.subr.bf16.mxu0 0
        %1450 = vmatpush1.bf16.msra.mxu0 0
        %1451 = vmatprep.mubr.bf16.mxu0 0
        %1452 = vmatmul.mubr.bf16.gmra.mrb[0].mxu0 %v1414
        %v1453 = vpop.f32.mrb[0].mxu0
        %v1454 = vadd.f32 0.0, %v1453
        %v1455 = vpop.f32.mrb[0].mxu0
        %v1456 = vpop.f32.mrb[0].mxu0
        %v1457 = vpop.f32.mrb[0].mxu0
        %1458 = vdwg.mxu0
        %1459 = vrot.lane.b32.xlu0 %v632, 64
        %v1460 = vpop.permute.xlu0 %1459
        %v1462 = vsel %vm636, %v1121, 0
        %v1465 = vsel %vm1127, %v1460, 0
        %1467 = vmatprep.subr.bf16.mxu0 0
        %1468 = vmatpush1.bf16.msra.mxu0 %v1465
        %1469 = vmatprep.subr.bf16.mxu0 0
        %1470 = vmatpush1.bf16.msra.mxu0 0
        %1471 = vmatprep.subr.bf16.mxu0 0
        %1472 = vmatpush1.bf16.msra.mxu0 0
        %1473 = vmatprep.subr.bf16.mxu0 0
        %1474 = vmatpush1.bf16.msra.mxu0 0
        %1475 = vmatprep.subr.bf16.mxu0 0
        %1476 = vmatpush1.bf16.msra.mxu0 0
        %1477 = vmatprep.subr.bf16.mxu0 0
        %1478 = vmatpush1.bf16.msra.mxu0 0
        %1479 = vmatprep.subr.bf16.mxu0 0
        %1480 = vmatpush1.bf16.msra.mxu0 0
        %1481 = vmatprep.subr.bf16.mxu0 0
        %1482 = vmatpush1.bf16.msra.mxu0 0
        %1483 = vmatprep.subr.bf16.mxu0 0
        %1484 = vmatpush1.bf16.msra.mxu0 0
        %1485 = vmatprep.subr.bf16.mxu0 0
        %1486 = vmatpush1.bf16.msra.mxu0 0
        %1487 = vmatprep.subr.bf16.mxu0 0
        %1488 = vmatpush1.bf16.msra.mxu0 0
        %1489 = vmatprep.subr.bf16.mxu0 0
        %1490 = vmatpush1.bf16.msra.mxu0 0
        %1491 = vmatprep.subr.bf16.mxu0 0
        %1492 = vmatpush1.bf16.msra.mxu0 0
        %1493 = vmatprep.subr.bf16.mxu0 0
        %1494 = vmatpush1.bf16.msra.mxu0 0
        %1495 = vmatprep.subr.bf16.mxu0 0
        %1496 = vmatpush1.bf16.msra.mxu0 0
        %1497 = vmatprep.subr.bf16.mxu0 0
        %1498 = vmatpush1.bf16.msra.mxu0 0
        %1499 = vmatprep.mubr.bf16.mxu0 0
        %1500 = vmatmul.mubr.bf16.gmra.mrb[0].mxu0 %v1462
        %v1501 = vpop.f32.mrb[0].mxu0
        %v1502 = vadd.f32 0.0, %v1501
        %v1503 = vpop.f32.mrb[0].mxu0
        %v1504 = vpop.f32.mrb[0].mxu0
        %v1505 = vpop.f32.mrb[0].mxu0
        %1506 = vdwg.mxu0
        %v1507 = vpack.c.bf16 %v1214, %v1166
        %v1508 = vpack.c.bf16 %v1310, %v1262
        %v1509 = vpack.c.bf16 %v1406, %v1358
        %v1510 = vpack.c.bf16 %v1502, %v1454
        %v1511 = vld [vmem:[#allocation7] sm:$0xf]
        %v1512 = vld [vmem:[#allocation7 + $0x4] sm:$0xf]
        %v1513 = vld [vmem:[#allocation7 + $0x8] sm:$0xf]
        %v1514 = vld [vmem:[#allocation7 + $0xc] sm:$0xf]
        %v1516 = vsel %vm636, %v1507, 0
        %v1519 = vsel %vm1127, %v1511, 0
        %1521 = vmatprep.subr.bf16.mxu0 0
        %1522 = vmatpush1.bf16.msra.mxu0 %v1519
        %1523 = vmatprep.subr.bf16.mxu0 0
        %1524 = vmatpush1.bf16.msra.mxu0 0
        %1525 = vmatprep.subr.bf16.mxu0 0
        %1526 = vmatpush1.bf16.msra.mxu0 0
        %1527 = vmatprep.subr.bf16.mxu0 0
        %1528 = vmatpush1.bf16.msra.mxu0 0
        %1529 = vmatprep.subr.bf16.mxu0 0
        %1530 = vmatpush1.bf16.msra.mxu0 0
        %1531 = vmatprep.subr.bf16.mxu0 0
        %1532 = vmatpush1.bf16.msra.mxu0 0
        %1533 = vmatprep.subr.bf16.mxu0 0
        %1534 = vmatpush1.bf16.msra.mxu0 0
        %1535 = vmatprep.subr.bf16.mxu0 0
        %1536 = vmatpush1.bf16.msra.mxu0 0
        %1537 = vmatprep.subr.bf16.mxu0 0
        %1538 = vmatpush1.bf16.msra.mxu0 0
        %1539 = vmatprep.subr.bf16.mxu0 0
        %1540 = vmatpush1.bf16.msra.mxu0 0
        %1541 = vmatprep.subr.bf16.mxu0 0
        %1542 = vmatpush1.bf16.msra.mxu0 0
        %1543 = vmatprep.subr.bf16.mxu0 0
        %1544 = vmatpush1.bf16.msra.mxu0 0
        %1545 = vmatprep.subr.bf16.mxu0 0
        %1546 = vmatpush1.bf16.msra.mxu0 0
        %1547 = vmatprep.subr.bf16.mxu0 0
        %1548 = vmatpush1.bf16.msra.mxu0 0
        %1549 = vmatprep.subr.bf16.mxu0 0
        %1550 = vmatpush1.bf16.msra.mxu0 0
        %1551 = vmatprep.subr.bf16.mxu0 0
        %1552 = vmatpush1.bf16.msra.mxu0 0
        %1553 = vmatprep.mubr.bf16.mxu0 0
        %1554 = vmatmul.mubr.bf16.gmra.mrb[0].mxu0 %v1516
        %v1555 = vpop.f32.mrb[0].mxu0
        %v1556 = vadd.f32 0.0, %v1555
        %v1557 = vpop.f32.mrb[0].mxu0
        %v1558 = vpop.f32.mrb[0].mxu0
        %v1559 = vadd.f32 0.0, %v1558
        %v1560 = vpop.f32.mrb[0].mxu0
        %1561 = vdwg.mxu0
        %v1563 = vsel %vm636, %v1508, 0
        %v1566 = vsel %vm1127, %v1512, 0
        %1568 = vmatprep.subr.bf16.mxu0 0
        %1569 = vmatpush1.bf16.msra.mxu0 %v1566
        %1570 = vmatprep.subr.bf16.mxu0 0
        %1571 = vmatpush1.bf16.msra.mxu0 0
        %1572 = vmatprep.subr.bf16.mxu0 0
        %1573 = vmatpush1.bf16.msra.mxu0 0
        %1574 = vmatprep.subr.bf16.mxu0 0
        %1575 = vmatpush1.bf16.msra.mxu0 0
        %1576 = vmatprep.subr.bf16.mxu0 0
        %1577 = vmatpush1.bf16.msra.mxu0 0
        %1578 = vmatprep.subr.bf16.mxu0 0
        %1579 = vmatpush1.bf16.msra.mxu0 0
        %1580 = vmatprep.subr.bf16.mxu0 0
        %1581 = vmatpush1.bf16.msra.mxu0 0
        %1582 = vmatprep.subr.bf16.mxu0 0
        %1583 = vmatpush1.bf16.msra.mxu0 0
        %1584 = vmatprep.subr.bf16.mxu0 0
        %1585 = vmatpush1.bf16.msra.mxu0 0
        %1586 = vmatprep.subr.bf16.mxu0 0
        %1587 = vmatpush1.bf16.msra.mxu0 0
        %1588 = vmatprep.subr.bf16.mxu0 0
        %1589 = vmatpush1.bf16.msra.mxu0 0
        %1590 = vmatprep.subr.bf16.mxu0 0
        %1591 = vmatpush1.bf16.msra.mxu0 0
        %1592 = vmatprep.subr.bf16.mxu0 0
        %1593 = vmatpush1.bf16.msra.mxu0 0
        %1594 = vmatprep.subr.bf16.mxu0 0
        %1595 = vmatpush1.bf16.msra.mxu0 0
        %1596 = vmatprep.subr.bf16.mxu0 0
        %1597 = vmatpush1.bf16.msra.mxu0 0
        %1598 = vmatprep.subr.bf16.mxu0 0
        %1599 = vmatpush1.bf16.msra.mxu0 0
        %1600 = vmatprep.mubr.bf16.mxu0 0
        %1601 = vmatmul.mubr.bf16.gmra.mrb[0].mxu0 %v1563
        %v1602 = vpop.f32.mrb[0].mxu0
        %v1603 = vadd.f32 0.0, %v1602
        %v1604 = vpop.f32.mrb[0].mxu0
        %v1605 = vpop.f32.mrb[0].mxu0
        %v1606 = vadd.f32 0.0, %v1605
        %v1607 = vpop.f32.mrb[0].mxu0
        %1608 = vdwg.mxu0
        %v1610 = vsel %vm636, %v1509, 0
        %v1613 = vsel %vm1127, %v1513, 0
        %1615 = vmatprep.subr.bf16.mxu0 0
        %1616 = vmatpush1.bf16.msra.mxu0 %v1613
        %1617 = vmatprep.subr.bf16.mxu0 0
        %1618 = vmatpush1.bf16.msra.mxu0 0
        %1619 = vmatprep.subr.bf16.mxu0 0
        %1620 = vmatpush1.bf16.msra.mxu0 0
        %1621 = vmatprep.subr.bf16.mxu0 0
        %1622 = vmatpush1.bf16.msra.mxu0 0
        %1623 = vmatprep.subr.bf16.mxu0 0
        %1624 = vmatpush1.bf16.msra.mxu0 0
        %1625 = vmatprep.subr.bf16.mxu0 0
        %1626 = vmatpush1.bf16.msra.mxu0 0
        %1627 = vmatprep.subr.bf16.mxu0 0
        %1628 = vmatpush1.bf16.msra.mxu0 0
        %1629 = vmatprep.subr.bf16.mxu0 0
        %1630 = vmatpush1.bf16.msra.mxu0 0
        %1631 = vmatprep.subr.bf16.mxu0 0
        %1632 = vmatpush1.bf16.msra.mxu0 0
        %1633 = vmatprep.subr.bf16.mxu0 0
        %1634 = vmatpush1.bf16.msra.mxu0 0
        %1635 = vmatprep.subr.bf16.mxu0 0
        %1636 = vmatpush1.bf16.msra.mxu0 0
        %1637 = vmatprep.subr.bf16.mxu0 0
        %1638 = vmatpush1.bf16.msra.mxu0 0
        %1639 = vmatprep.subr.bf16.mxu0 0
        %1640 = vmatpush1.bf16.msra.mxu0 0
        %1641 = vmatprep.subr.bf16.mxu0 0
        %1642 = vmatpush1.bf16.msra.mxu0 0
        %1643 = vmatprep.subr.bf16.mxu0 0
        %1644 = vmatpush1.bf16.msra.mxu0 0
        %1645 = vmatprep.subr.bf16.mxu0 0
        %1646 = vmatpush1.bf16.msra.mxu0 0
        %1647 = vmatprep.mubr.bf16.mxu0 0
        %1648 = vmatmul.mubr.bf16.gmra.mrb[0].mxu0 %v1610
        %v1649 = vpop.f32.mrb[0].mxu0
        %v1650 = vadd.f32 0.0, %v1649
        %v1651 = vpop.f32.mrb[0].mxu0
        %v1652 = vpop.f32.mrb[0].mxu0
        %v1653 = vadd.f32 0.0, %v1652
        %v1654 = vpop.f32.mrb[0].mxu0
        %1655 = vdwg.mxu0
        %v1657 = vsel %vm636, %v1510, 0
        %v1660 = vsel %vm1127, %v1514, 0
        %1662 = vmatprep.subr.bf16.mxu0 0
        %1663 = vmatpush1.bf16.msra.mxu0 %v1660
        %1664 = vmatprep.subr.bf16.mxu0 0
        %1665 = vmatpush1.bf16.msra.mxu0 0
        %1666 = vmatprep.subr.bf16.mxu0 0
        %1667 = vmatpush1.bf16.msra.mxu0 0
        %1668 = vmatprep.subr.bf16.mxu0 0
        %1669 = vmatpush1.bf16.msra.mxu0 0
        %1670 = vmatprep.subr.bf16.mxu0 0
        %1671 = vmatpush1.bf16.msra.mxu0 0
        %1672 = vmatprep.subr.bf16.mxu0 0
        %1673 = vmatpush1.bf16.msra.mxu0 0
        %1674 = vmatprep.subr.bf16.mxu0 0
        %1675 = vmatpush1.bf16.msra.mxu0 0
        %1676 = vmatprep.subr.bf16.mxu0 0
        %1677 = vmatpush1.bf16.msra.mxu0 0
        %1678 = vmatprep.subr.bf16.mxu0 0
        %1679 = vmatpush1.bf16.msra.mxu0 0
        %1680 = vmatprep.subr.bf16.mxu0 0
        %1681 = vmatpush1.bf16.msra.mxu0 0
        %1682 = vmatprep.subr.bf16.mxu0 0
        %1683 = vmatpush1.bf16.msra.mxu0 0
        %1684 = vmatprep.subr.bf16.mxu0 0
        %1685 = vmatpush1.bf16.msra.mxu0 0
        %1686 = vmatprep.subr.bf16.mxu0 0
        %1687 = vmatpush1.bf16.msra.mxu0 0
        %1688 = vmatprep.subr.bf16.mxu0 0
        %1689 = vmatpush1.bf16.msra.mxu0 0
        %1690 = vmatprep.subr.bf16.mxu0 0
        %1691 = vmatpush1.bf16.msra.mxu0 0
        %1692 = vmatprep.subr.bf16.mxu0 0
        %1693 = vmatpush1.bf16.msra.mxu0 0
        %1694 = vmatprep.mubr.bf16.mxu0 0
        %1695 = vmatmul.mubr.bf16.gmra.mrb[0].mxu0 %v1657
        %v1696 = vpop.f32.mrb[0].mxu0
        %v1697 = vadd.f32 0.0, %v1696
        %v1698 = vpop.f32.mrb[0].mxu0
        %v1699 = vpop.f32.mrb[0].mxu0
        %v1700 = vadd.f32 0.0, %v1699
        %v1701 = vpop.f32.mrb[0].mxu0
        %1702 = vdwg.mxu0
        %v1703 = vsel %vm560, %v1556, 0.0
        %v1704 = vsel %vm560, %v1603, 0.0
        %v1705 = vadd.f32 %v1703, %v1704
        %v1706 = vsel %vm560, %v1650, 0.0
        %v1707 = vadd.f32 %v1705, %v1706
        %v1708 = vsel %vm560, %v1697, 0.0
        %v1709 = vadd.f32 %v1707, %v1708
        %v1710 = vsel %vm560, %v1559, 0.0
        %v1711 = vsel %vm560, %v1606, 0.0
        %v1712 = vadd.f32 %v1710, %v1711
        %v1713 = vsel %vm560, %v1653, 0.0
        %v1714 = vadd.f32 %v1712, %v1713
        %v1715 = vsel %vm560, %v1700, 0.0
        %v1716 = vadd.f32 %v1714, %v1715
        %v1717 = vadd.f32 %v541, %v1709
        %v1718 = vadd.f32 %v542, %v1716
        %v1719 = vld [vmem:[#allocation8] sm:$0x1]
        %v1720 = vld [vmem:[#allocation10] sm:$0x1]
        %v1721 = vsel %vm560, %v1717, 0.0
        %1722 = vadd.xlane.f32.xlu0 %v1721
        %v1723 = vpop.xlane.xlu0 %1722
        %v1724 = vsel %vm560, %v1718, 0.0
        %1725 = vadd.xlane.f32.xlu0 %v1724
        %v1726 = vpop.xlane.xlu0 %1725
        %v1727 = vrcp.pop 32.0
        %v1728 = vmul.f32 %v1723, %v1727
        %v1729 = vmul.f32 %v1726, %v1727
        %v1730 = vsub.f32 %v1717, %v1728
        %v1731 = vsub.f32 %v1718, %v1729
        %v1732 = vmul.f32 %v1730, %v1730
        %v1733 = vmul.f32 %v1731, %v1731
        %v1734 = vsel %vm560, %v1732, 0.0
        %1735 = vadd.xlane.f32.xlu0 %v1734
        %v1736 = vpop.xlane.xlu0 %1735
        %v1737 = vsel %vm560, %v1733, 0.0
        %1738 = vadd.xlane.f32.xlu0 %v1737
        %v1739 = vpop.xlane.xlu0 %1738
        %v1740 = vmul.f32 %v1736, %v1727
        %v1741 = vmul.f32 %v1739, %v1727
        %v1742 = vadd.f32 %v1740, 1e-05
        %v1743 = vadd.f32 %v1741, 1e-05
        %v1744 = vrsqrt.pop %v1742
        %v1745 = vrsqrt.pop %v1743
        %v1746 = vmul.f32 %v1730, %v1744
        %v1747 = vmul.f32 %v1731, %v1745
        %v1749 = vlaneseq
        %v1750 = vshrl.u32 %v1749, 7
        %v1751 = vsub.s32 0, %v1750
        %v1752 = vrot.slane %v1719, %v1751
        %v1754 = vmul.f32 %v1746, %v1752
        %v1755 = vmul.f32 %v1747, %v1752
        %v1757 = vlaneseq
        %v1758 = vshrl.u32 %v1757, 7
        %v1759 = vsub.s32 0, %v1758
        %v1760 = vrot.slane %v1720, %v1759
        %v1762 = vadd.f32 %v1754, %v1760
        %v1763 = vadd.f32 %v1755, %v1760
        %v1764 = vpack.c.bf16 %v1763, %v1762
        %v1765 = vld [vmem:[#allocation11] sm:$0xf]
        %v1766 = vld [vmem:[#allocation11 + $0x4] sm:$0xf]
        %v1767 = vld [vmem:[#allocation11 + $0x8] sm:$0xf]
        %v1768 = vld [vmem:[#allocation11 + $0xc] sm:$0xf]
        %v1769 = vld [vmem:[#allocation13] sm:$0x1]
        %v1771 = vlaneseq
        %v1772 = vshrl.u32 %v1771, 7
        %v1773 = vsub.s32 0, %v1772
        %v1774 = vrot.slane %v1769, %v1773
        %v1780 = vunpack.c.l.b16 %v1765
        %v1781 = vunpack.c.l.b16 %v1766
        %v1782 = vunpack.c.l.b16 %v1767
        %v1783 = vunpack.c.l.b16 %v1768
        %v1784 = vpack.c.b16 %v1781, %v1780
        %v1785 = vpack.c.b16 %v1783, %v1782
        %v1789 = vsel %vm560, %v1764, 0
        %1791 = vmatprep.subr.bf16.mxu0 0
        %1792 = vmatpush1.bf16.msra.mxu0 %v1784
        %1793 = vmatprep.subr.bf16.mxu0 0
        %1794 = vmatpush1.bf16.msra.mxu0 %v1785
        %1795 = vmatprep.subr.bf16.mxu0 0
        %1796 = vmatpush1.bf16.msra.mxu0 0
        %1797 = vmatprep.subr.bf16.mxu0 0
        %1798 = vmatpush1.bf16.msra.mxu0 0
        %1799 = vmatprep.subr.bf16.mxu0 0
        %1800 = vmatpush1.bf16.msra.mxu0 0
        %1801 = vmatprep.subr.bf16.mxu0 0
        %1802 = vmatpush1.bf16.msra.mxu0 0
        %1803 = vmatprep.subr.bf16.mxu0 0
        %1804 = vmatpush1.bf16.msra.mxu0 0
        %1805 = vmatprep.subr.bf16.mxu0 0
        %1806 = vmatpush1.bf16.msra.mxu0 0
        %1807 = vmatprep.subr.bf16.mxu0 0
        %1808 = vmatpush1.bf16.msra.mxu0 0
        %1809 = vmatprep.subr.bf16.mxu0 0
        %1810 = vmatpush1.bf16.msra.mxu0 0
        %1811 = vmatprep.subr.bf16.mxu0 0
        %1812 = vmatpush1.bf16.msra.mxu0 0
        %1813 = vmatprep.subr.bf16.mxu0 0
        %1814 = vmatpush1.bf16.msra.mxu0 0
        %1815 = vmatprep.subr.bf16.mxu0 0
        %1816 = vmatpush1.bf16.msra.mxu0 0
        %1817 = vmatprep.subr.bf16.mxu0 0
        %1818 = vmatpush1.bf16.msra.mxu0 0
        %1819 = vmatprep.subr.bf16.mxu0 0
        %1820 = vmatpush1.bf16.msra.mxu0 0
        %1821 = vmatprep.subr.bf16.mxu0 0
        %1822 = vmatpush1.bf16.msra.mxu0 0
        %1823 = vmatprep.mubr.bf16.mxu0 0
        %1824 = vmatmul.mubr.bf16.gmra.mrb[0].mxu0 %v1789
        %v1825 = vpop.f32.mrb[0].mxu0
        %v1826 = vadd.f32 %v1774, %v1825
        %v1827 = vpop.f32.mrb[0].mxu0
        %v1828 = vpop.f32.mrb[0].mxu0
        %v1829 = vadd.f32 %v1774, %v1828
        %v1830 = vpop.f32.mrb[0].mxu0
        %1831 = vdwg.mxu0
        %v1832 = vmax.f32 %v1826, 0.0
        %v1833 = vmax.f32 %v1829, 0.0
        %v1834 = vpack.c.bf16 %v1833, %v1832
        %v1835 = vld [vmem:[#allocation14] sm:$0xf]
        %v1836 = vld [vmem:[#allocation14 + $0x4] sm:$0xf]
        %v1837 = vld [vmem:[#allocation14 + $0x8] sm:$0xf]
        %v1838 = vld [vmem:[#allocation14 + $0xc] sm:$0xf]
        %v1839 = vld [vmem:[#allocation14 + $0x10] sm:$0xf]
        %v1840 = vld [vmem:[#allocation14 + $0x14] sm:$0xf]
        %v1841 = vld [vmem:[#allocation14 + $0x18] sm:$0xf]
        %v1842 = vld [vmem:[#allocation14 + $0x1c] sm:$0xf]
        %v1843 = vld [vmem:[#allocation16] sm:$0x1]
        %v1845 = vlaneseq
        %v1846 = vshrl.u32 %v1845, 7
        %v1847 = vsub.s32 0, %v1846
        %v1848 = vrot.slane %v1843, %v1847
        %v1858 = vunpack.c.l.b16 %v1835
        %v1859 = vunpack.c.l.b16 %v1836
        %v1860 = vunpack.c.l.b16 %v1837
        %v1861 = vunpack.c.l.b16 %v1838
        %v1862 = vunpack.c.l.b16 %v1839
        %v1863 = vunpack.c.l.b16 %v1840
        %v1864 = vunpack.c.l.b16 %v1841
        %v1865 = vunpack.c.l.b16 %v1842
        %v1866 = vpack.c.b16 %v1859, %v1858
        %v1867 = vpack.c.b16 %v1861, %v1860
        %v1868 = vpack.c.b16 %v1863, %v1862
        %v1869 = vpack.c.b16 %v1865, %v1864
        %vm1874 = vcmask 523264
        %v1876 = vsel %vm1874, %v1834, 0
        %1878 = vmatprep.subr.bf16.mxu0 0
        %1879 = vmatpush1.bf16.msra.mxu0 %v1866
        %1880 = vmatprep.subr.bf16.mxu0 0
        %1881 = vmatpush1.bf16.msra.mxu0 %v1867
        %1882 = vmatprep.subr.bf16.mxu0 0
        %1883 = vmatpush1.bf16.msra.mxu0 %v1868
        %1884 = vmatprep.subr.bf16.mxu0 0
        %1885 = vmatpush1.bf16.msra.mxu0 %v1869
        %1886 = vmatprep.subr.bf16.mxu0 0
        %1887 = vmatpush1.bf16.msra.mxu0 0
        %1888 = vmatprep.subr.bf16.mxu0 0
        %1889 = vmatpush1.bf16.msra.mxu0 0
        %1890 = vmatprep.subr.bf16.mxu0 0
        %1891 = vmatpush1.bf16.msra.mxu0 0
        %1892 = vmatprep.subr.bf16.mxu0 0
        %1893 = vmatpush1.bf16.msra.mxu0 0
        %1894 = vmatprep.subr.bf16.mxu0 0
        %1895 = vmatpush1.bf16.msra.mxu0 0
        %1896 = vmatprep.subr.bf16.mxu0 0
        %1897 = vmatpush1.bf16.msra.mxu0 0
        %1898 = vmatprep.subr.bf16.mxu0 0
        %1899 = vmatpush1.bf16.msra.mxu0 0
        %1900 = vmatprep.subr.bf16.mxu0 0
        %1901 = vmatpush1.bf16.msra.mxu0 0
        %1902 = vmatprep.subr.bf16.mxu0 0
        %1903 = vmatpush1.bf16.msra.mxu0 0
        %1904 = vmatprep.subr.bf16.mxu0 0
        %1905 = vmatpush1.bf16.msra.mxu0 0
        %1906 = vmatprep.subr.bf16.mxu0 0
        %1907 = vmatpush1.bf16.msra.mxu0 0
        %1908 = vmatprep.subr.bf16.mxu0 0
        %1909 = vmatpush1.bf16.msra.mxu0 0
        %1910 = vmatprep.mubr.bf16.mxu0 0
        %1911 = vmatmul.mubr.bf16.gmra.mrb[0].mxu0 %v1876
        %v1912 = vpop.f32.mrb[0].mxu0
        %v1913 = vadd.f32 %v1848, %v1912
        %v1914 = vpop.f32.mrb[0].mxu0
        %v1915 = vpop.f32.mrb[0].mxu0
        %v1916 = vadd.f32 %v1848, %v1915
        %v1917 = vpop.f32.mrb[0].mxu0
        %1918 = vdwg.mxu0
        %v1919 = vadd.f32 %v1762, %v1913
        %v1920 = vadd.f32 %v1763, %v1916
        %v1921 = vld [vmem:[#allocation17] sm:$0x1]
        %v1922 = vld [vmem:[#allocation19] sm:$0x1]
        %v1923 = vsel %vm560, %v1919, 0.0
        %1924 = vadd.xlane.f32.xlu0 %v1923
        %v1925 = vpop.xlane.xlu0 %1924
        %v1926 = vsel %vm560, %v1920, 0.0
        %1927 = vadd.xlane.f32.xlu0 %v1926
        %v1928 = vpop.xlane.xlu0 %1927
        %v1929 = vmul.f32 %v1925, %v1727
        %v1930 = vmul.f32 %v1928, %v1727
        %v1931 = vsub.f32 %v1919, %v1929
        %v1932 = vsub.f32 %v1920, %v1930
        %v1933 = vmul.f32 %v1931, %v1931
        %v1934 = vmul.f32 %v1932, %v1932
        %v1935 = vsel %vm560, %v1933, 0.0
        %1936 = vadd.xlane.f32.xlu0 %v1935
        %v1937 = vpop.xlane.xlu0 %1936
        %v1938 = vsel %vm560, %v1934, 0.0
        %1939 = vadd.xlane.f32.xlu0 %v1938
        %v1940 = vpop.xlane.xlu0 %1939
        %v1941 = vmul.f32 %v1937, %v1727
        %v1942 = vmul.f32 %v1940, %v1727
        %v1943 = vadd.f32 %v1941, 1e-05
        %v1944 = vadd.f32 %v1942, 1e-05
        %v1945 = vrsqrt.pop %v1943
        %v1946 = vrsqrt.pop %v1944
        %v1947 = vmul.f32 %v1931, %v1945
        %v1948 = vmul.f32 %v1932, %v1946
        %v1950 = vlaneseq
        %v1951 = vshrl.u32 %v1950, 7
        %v1952 = vsub.s32 0, %v1951
        %v1953 = vrot.slane %v1921, %v1952
        %v1955 = vmul.f32 %v1947, %v1953
        %v1956 = vmul.f32 %v1948, %v1953
        %v1958 = vlaneseq
        %v1959 = vshrl.u32 %v1958, 7
        %v1960 = vsub.s32 0, %v1959
        %v1961 = vrot.slane %v1922, %v1960
        %v1963 = vadd.f32 %v1955, %v1961
        %v1964 = vadd.f32 %v1956, %v1961
        %1965 = vst.msk [vmem:[%s537] sm:$0xff] %vm560, %v1963
        %1966 = vst.msk [vmem:[%s537 + $0x8] sm:$0xff] %vm560, %v1964
        %s1967 = sand.u32 %s277, 1
        %s1968 = scalar_lea.sflag [#allocation4], %s1967
        %s1969 = sand.u32 %s277, 1
        %s1970 = smul.addr %s1969, 16
        %s1971 = scalar_lea.vmem [#allocation20], %s1970
        // Predicated region
        $region109: #{tpu_custom_call.1} parent=63 // pred_check
          %p1972 = pneg %p287
        $region110: #{tpu_custom_call.1} parent=63 // pred_check_branch
          %1974 = sbr.rel (%p1972) target = $region112
        $region111: #{tpu_custom_call.1} parent=63 // pred_region
          %s1975 = smul.u32 2, %s33
          %s1977 = ssub.s32 256, 256
          %1978 = vsyncadd %s1968, %s1977
          %s1979 = smul.addr %s1975, 128
          %s1980 = scalar_lea.hbm %s11, %s1979
          %s1981 = sshll.u32 %s1971, 4
          %s1982 = int_to_ptr.vmem [resolvable:$true] %s1981
          %1987 = dma.vmem_to_hbm [thread:$0]  %s1982, 256, %s1980, %s1968, 128, 128, 8
        $region112: #{tpu_custom_call.1} parent=63 // pred_fallthru
          _
      $region64: #{tpu_custom_call.1} parent=5 // pred_fallthru
        _
      %p1988 = scmp.le.s32.totalorder 2, %s28
      // Predicated region
      $region113: #{tpu_custom_call.1} parent=5 // pred_check
        %p1989 = pneg %p1988
      $region114: #{tpu_custom_call.1} parent=5 // pred_check_branch
        %1991 = sbr.rel (%p1989) target = $region116
      $region115: #{tpu_custom_call.1} parent=5 // pred_region
        %s1992 = ssub.s32 %s28, 2
        // Predicated region
        $region117: #{tpu_custom_call.1} parent=115 // pred_check
          %p1993 = pneg %p293
        $region118: #{tpu_custom_call.1} parent=115 // pred_check_branch
          %1995 = sbr.rel (%p1993) target = $region120
        $region119: #{tpu_custom_call.1} parent=115 // pred_region
          %s1996 = sand.u32 %s278, 1
          %s1997 = scalar_lea.sflag [#allocation4], %s1996
          %s1998 = sand.u32 %s278, 1
          %s1999 = smul.addr %s1998, 16
          %s2000 = scalar_lea.vmem [#allocation20], %s1999
          %2001 = dma.done %s1997, 256
        $region120: #{tpu_custom_call.1} parent=115 // pred_fallthru
          _
      $region116: #{tpu_custom_call.1} parent=5 // pred_fallthru
        _
    $region6: #{tpu_custom_call.1} parent=1 // loop_footer
      %s32 = sadd.s32 1, %s28
    $region7: #{tpu_custom_call.1} parent=1 // loop_footer_branch
      %27 = sbr.rel target = $region3
    $region8: #{tpu_custom_call.1} parent=1 // loop_exit
      _
    %2002 = vsyncpa [#allocation3], 1
    %s2003 = scalar_lea.sflag [#allocation3], 1
    %2004 = vsyncpa %s2003, 1
    %2005 = vsyncpa [#allocation6], 1
    %2006 = vsyncpa [#allocation9], 1
    %2007 = vsyncpa [#allocation12], 1
    %2008 = vsyncpa [#allocation15], 1
    %2009 = vsyncpa [#allocation18], 1
    %2010 = vsyncpa [#allocation4], 1
    %s2011 = scalar_lea.sflag [#allocation4], 1
    %2012 = vsyncpa %s2011, 1

</llo_original>
